<compile_context>
chip_gen: v6e
topology: v6e:2x2x1
jax: 0.10.0
libtpu: 0.0.40
codegen_flags: <defaults>
</compile_context>

<pallas_src>
import jax
import jax.numpy as jnp
from jax.experimental import pallas as pl
from jax.experimental.pallas import tpu as pltpu


def _round_up(x, m):
    return ((x + m - 1) // m) * m


def _vmem_capacity_bytes(default=64 * 1024 * 1024):
    try:
        return int(pltpu.get_tpu_info().vmem_capacity_bytes)
    except Exception:
        return default


def _make_plane_kernel(kd, kh, kw, cin, ho, wo, wp, k, kp):
    """Kernel for one (batch, output-depth-plane) grid step.

    refs (in order):
      x_0 .. x_{kd-1}: (Cin, Hp*Wp)  padded input planes for depth taps a=0..kd-1
      w_ref:           (Cout_p, Kp)  flipped weights, bias folded at column `k`
      o_ref:           (Cout_p, Ho, Wo)  output tile, final NCDHW layout
      p_ref:           (Kp, Le)      VMEM scratch: on-chip im2col staging buffer
    """
    le = ho * wp  # extended plane length (includes kw-1 garbage cols per row)

    def kernel(*refs):
        x_refs = refs[:kd]
        w_ref = refs[kd]
        o_ref = refs[kd + 1]
        p_ref = refs[kd + 2]

        # ---- on-chip im2col: every in-plane tap is a static lane shift ----
        for a in range(kd):
            plane = x_refs[a][...]                                # (Cin, Hp*Wp)
            for b in range(kh):
                for c in range(kw):
                    off = b * wp + c
                    row0 = ((a * kh + b) * kw + c) * cin
                    p_ref[row0:row0 + cin, :] = plane[:, off:off + le]
        # folded-bias row of ones + zero rows padding K up to a multiple of 8
        p_ref[k:k + 1, :] = jnp.ones((1, le), jnp.float32)
        if kp > k + 1:
            p_ref[k + 1:kp, :] = jnp.zeros((kp - k - 1, le), jnp.float32)

        # ---- single fused K-contraction on the MXU; bias is already folded ----
        y = jnp.dot(w_ref[...], p_ref[...], preferred_element_type=jnp.float32)
        y = jnp.maximum(y, 0.0)                                   # ReLU

        # ---- drop garbage columns on-chip, store straight into NCDHW ----
        for yo in range(ho):
            o_ref[:, yo, :] = y[:, yo * wp:yo * wp + wo].astype(o_ref.dtype)

    return kernel


def conv_transpose_block_3d(x_ncdhw, weight_iodhw, bias):
    """Forward of ConvTransposeBlock3D with default args.

    x_ncdhw:      (N, Cin, D, H, W)       float32
    weight_iodhw: (Cin, Cout, kd, kh, kw) float32  (PyTorch ConvTranspose3d layout)
    bias:         (Cout,)                 float32
    returns       (N, Cout, Do, Ho, Wo) with Do = D + kd - 1 etc.
    """
    N, Cin, D, H, W = x_ncdhw.shape
    Cin_w, Cout, kd, kh, kw = weight_iodhw.shape
    assert Cin == Cin_w

    Do, Ho, Wo = D + kd - 1, H + kh - 1, W + kw - 1    # stride=1, pad=0, out_pad=0
    Dp = Do + kd - 1                                   # padded depth
    Hp = Ho + kh                                       # padded height (+1 extra zero
    #                                                    row: flat-plane read halo)
    Wp = Wo + kw - 1                                   # padded width
    HWp = Hp * Wp
    Le = Ho * Wp                                       # extended output plane length
    K = kd * kh * kw * Cin
    Kp = _round_up(K + 1, 8)                           # +1 bias row, sublane multiple
    Cout_p = _round_up(Cout, 8)

    # ---- input: NCDHW -> (N, Dp, Cin, Hp*Wp), zero padded (one ~input-sized copy) ----
    xt = jnp.transpose(x_ncdhw, (0, 2, 1, 3, 4))                       # (N, D, Cin, H, W)
    xt = jnp.pad(xt, ((0, 0), (kd - 1, kd - 1), (0, 0),
                      (kh - 1, kh), (kw - 1, kw - 1)))                 # (N, Dp, Cin, Hp, Wp)
    x_flat = xt.reshape(N, Dp, Cin, HWp)                               # free reshape

    # ---- weights: flip spatially, swap channels, flatten; fold bias as column K ----
    wf = weight_iodhw[:, :, ::-1, ::-1, ::-1]                          # (Cin, Cout, kd, kh, kw)
    wmat = jnp.transpose(wf, (2, 3, 4, 0, 1)).reshape(K, Cout).T       # (Cout, K), tap-major/ci-minor
    wmat_ext = jnp.zeros((Cout_p, Kp), jnp.float32)
    wmat_ext = wmat_ext.at[:Cout, :K].set(wmat.astype(jnp.float32))
    wmat_ext = wmat_ext.at[:Cout, K].set(bias.astype(jnp.float32))

    # ---- per-generation VMEM budget (v7x: 64 MiB/TC, v5e/v6e: 128 MiB) ----
    vmem_cap = _vmem_capacity_bytes()
    vmem_limit = max(32 * 1024 * 1024, min(int(0.45 * vmem_cap), 100 * 1024 * 1024))
    work_set = 4 * (kd * 2 * Cin * HWp        # kd input planes, double-buffered
                    + 2 * Cout_p * Kp         # resident weights (KB scale; see note)
                    + 2 * Cout_p * Ho * Wo    # output tile, double-buffered
                    + Kp * Le                 # on-chip patch scratch
                    + 2 * Cout_p * Le)        # matmul result + slicing temporaries
    assert work_set <= vmem_limit, (
        "per-plane working set (%d B) exceeds VMEM budget (%d B); "
        "TODO(synk): add an in-plane tile axis with halo DMA" % (work_set, vmem_limit))

    kernel = _make_plane_kernel(kd, kh, kw, Cin, Ho, Wo, Wp, K, Kp)

    in_specs = [
        # kd views of the same padded array, one per depth tap (reads input kd x total)
        pl.BlockSpec((None, None, Cin, HWp), (lambda n, z, a=a: (n, z + a, 0, 0)))
        for a in range(kd)
    ]
    # Weights + folded bias: constant index_map -> resident.  Default buffering kept:
    # the block is only Cout_p*Kp*4 bytes, so the second buffer is negligible and is
    # already counted in `work_set` above (review item 5).
    in_specs.append(pl.BlockSpec((Cout_p, Kp), lambda n, z: (0, 0)))

    out = pl.pallas_call(
        kernel,
        out_shape=jax.ShapeDtypeStruct((N, Cout_p, Do, Ho, Wo), jnp.float32),
        grid=(N, Do),
        in_specs=in_specs,
        out_specs=pl.BlockSpec((None, Cout_p, None, Ho, Wo),
                               lambda n, z: (n, 0, z, 0, 0)),
        scratch_shapes=[pltpu.VMEM((Kp, Le), jnp.float32)],
        compiler_params=pltpu.CompilerParams(
            dimension_semantics=("parallel", "parallel"),   # N*Do >= 8 steps -> megacore
            vmem_limit_bytes=vmem_limit,
        ),
    )(*([x_flat] * kd), wmat_ext)

    if Cout_p != Cout:
        out = out[:, :Cout]
    return out


if __name__ == "__main__":
    key = jax.random.PRNGKey(0)
    kx, kw_, kb = jax.random.split(key, 3)

    # small shapes consistent with the module
    N, Cin, Cout, D, H, W, k = 2, 4, 8, 16, 16, 16, 3
    x = jax.random.normal(kx, (N, Cin, D, H, W), jnp.float32)

    # deterministic PyTorch-like init: U(-1/sqrt(fan_in), 1/sqrt(fan_in))
    fan_in = Cout * k ** 3
    bound = 1.0 / (fan_in ** 0.5)
    weight = jax.random.uniform(kw_, (Cin, Cout, k, k, k), jnp.float32, -bound, bound)
    bias = jax.random.uniform(kb, (Cout,), jnp.float32, -bound, bound)

    fwd = jax.jit(conv_transpose_block_3d)
    out = jax.block_until_ready(fwd(x, weight, bias))

    # reference in plain XLA: stride-1 transposed conv == full-pad correlation with
    # the spatially-flipped, channel-swapped kernel; then bias + ReLU.
    wref = jnp.transpose(weight[:, :, ::-1, ::-1, ::-1], (1, 0, 2, 3, 4))  # (Cout, Cin, k, k, k)
    ref = jax.lax.conv_general_dilated(
        x, wref, window_strides=(1, 1, 1),
        padding=[(k - 1, k - 1)] * 3,
        dimension_numbers=("NCDHW", "OIDHW", "NCDHW"))
    ref = jnp.maximum(ref + bias.reshape(1, Cout, 1, 1, 1), 0.0)

    assert out.shape == ref.shape, (out.shape, ref.shape)
    err = float(jnp.max(jnp.abs(out - ref)))
    assert jnp.allclose(out, ref, rtol=1e-5, atol=3e-5), err
    print("KERNEL_OK")
</pallas_src>

<mosaic_0001>
module attributes {stable_mosaic.version = 11 : i64} {
  func.func @kernel(%arg0: i32, %arg1: i32, %arg2: memref<1x1x4x420xf32, #tpu.memory_space<vmem>>, %arg3: memref<1x1x4x420xf32, #tpu.memory_space<vmem>>, %arg4: memref<1x1x4x420xf32, #tpu.memory_space<vmem>>, %arg5: memref<8x112xf32, #tpu.memory_space<vmem>>, %arg6: memref<1x8x1x18x18xf32, #tpu.memory_space<vmem>>, %arg7: memref<112x360xf32, #tpu.memory_space<vmem>>) attributes {dimension_semantics = [#tpu.dimension_semantics<parallel>, #tpu.dimension_semantics<parallel>], iteration_bounds = array<i64: 2, 18>, scalar_prefetch = 0 : i64, scratch_operands = 1 : i64, tpu.core_type = #tpu.core_type<tc>, window_params = [{transform_indices = @transform_0, window_bounds = array<i64: 1, 1, 4, 420>}, {transform_indices = @transform_1, window_bounds = array<i64: 1, 1, 4, 420>}, {transform_indices = @transform_2, window_bounds = array<i64: 1, 1, 4, 420>}, {pipeline_mode = #tpu.pipeline_mode<synchronous>, transform_indices = @transform_3, window_bounds = array<i64: 8, 112>}, {transform_indices = @transform_4, window_bounds = array<i64: 1, 8, 1, 18, 18>}]} {
    %c0 = arith.constant 0 : index
    %c0_0 = arith.constant 0 : index
    %c0_1 = arith.constant 0 : index
    %c0_2 = arith.constant 0 : index
    %0 = vector.load %arg2[%c0, %c0_0, %c0_1, %c0_2] : memref<1x1x4x420xf32, #tpu.memory_space<vmem>>, vector<1x1x4x420xf32>
    %1 = vector.shape_cast %0 : vector<1x1x4x420xf32> to vector<4x420xf32>
    %2 = vector.extract_strided_slice %1 {offsets = [0, 0], sizes = [4, 360], strides = [1, 1]} : vector<4x420xf32> to vector<4x360xf32>
    %c0_3 = arith.constant 0 : index
    %c0_4 = arith.constant 0 : index
    %3 = vector.load %arg7[%c0_3, %c0_4] : memref<112x360xf32, #tpu.memory_space<vmem>>, vector<4x360xf32>
    tpu.vector_store %arg7[%c0_3, %c0_4], %2 {strides = array<i32>} : memref<112x360xf32, #tpu.memory_space<vmem>>, vector<4x360xf32>,
    %4 = vector.extract_strided_slice %1 {offsets = [0, 1], sizes = [4, 360], strides = [1, 1]} : vector<4x420xf32> to vector<4x360xf32>
    %c4 = arith.constant 4 : index
    %c0_5 = arith.constant 0 : index
    %5 = vector.load %arg7[%c4, %c0_5] : memref<112x360xf32, #tpu.memory_space<vmem>>, vector<4x360xf32>
    tpu.vector_store %arg7[%c4, %c0_5], %4 {strides = array<i32>} : memref<112x360xf32, #tpu.memory_space<vmem>>, vector<4x360xf32>,
    %6 = vector.extract_strided_slice %1 {offsets = [0, 2], sizes = [4, 360], strides = [1, 1]} : vector<4x420xf32> to vector<4x360xf32>
    %c8 = arith.constant 8 : index
    %c0_6 = arith.constant 0 : index
    %7 = vector.load %arg7[%c8, %c0_6] : memref<112x360xf32, #tpu.memory_space<vmem>>, vector<4x360xf32>
    tpu.vector_store %arg7[%c8, %c0_6], %6 {strides = array<i32>} : memref<112x360xf32, #tpu.memory_space<vmem>>, vector<4x360xf32>,
    %8 = vector.extract_strided_slice %1 {offsets = [0, 20], sizes = [4, 360], strides = [1, 1]} : vector<4x420xf32> to vector<4x360xf32>
    %c12 = arith.constant 12 : index
    %c0_7 = arith.constant 0 : index
    %9 = vector.load %arg7[%c12, %c0_7] : memref<112x360xf32, #tpu.memory_space<vmem>>, vector<4x360xf32>
    tpu.vector_store %arg7[%c12, %c0_7], %8 {strides = array<i32>} : memref<112x360xf32, #tpu.memory_space<vmem>>, vector<4x360xf32>,
    %10 = vector.extract_strided_slice %1 {offsets = [0, 21], sizes = [4, 360], strides = [1, 1]} : vector<4x420xf32> to vector<4x360xf32>
    %c16 = arith.constant 16 : index
    %c0_8 = arith.constant 0 : index
    %11 = vector.load %arg7[%c16, %c0_8] : memref<112x360xf32, #tpu.memory_space<vmem>>, vector<4x360xf32>
    tpu.vector_store %arg7[%c16, %c0_8], %10 {strides = array<i32>} : memref<112x360xf32, #tpu.memory_space<vmem>>, vector<4x360xf32>,
    %12 = vector.extract_strided_slice %1 {offsets = [0, 22], sizes = [4, 360], strides = [1, 1]} : vector<4x420xf32> to vector<4x360xf32>
    %c20 = arith.constant 20 : index
    %c0_9 = arith.constant 0 : index
    %13 = vector.load %arg7[%c20, %c0_9] : memref<112x360xf32, #tpu.memory_space<vmem>>, vector<4x360xf32>
    tpu.vector_store %arg7[%c20, %c0_9], %12 {strides = array<i32>} : memref<112x360xf32, #tpu.memory_space<vmem>>, vector<4x360xf32>,
    %14 = vector.extract_strided_slice %1 {offsets = [0, 40], sizes = [4, 360], strides = [1, 1]} : vector<4x420xf32> to vector<4x360xf32>
    %c24 = arith.constant 24 : index
    %c0_10 = arith.constant 0 : index
    %15 = vector.load %arg7[%c24, %c0_10] : memref<112x360xf32, #tpu.memory_space<vmem>>, vector<4x360xf32>
    tpu.vector_store %arg7[%c24, %c0_10], %14 {strides = array<i32>} : memref<112x360xf32, #tpu.memory_space<vmem>>, vector<4x360xf32>,
    %16 = vector.extract_strided_slice %1 {offsets = [0, 41], sizes = [4, 360], strides = [1, 1]} : vector<4x420xf32> to vector<4x360xf32>
    %c28 = arith.constant 28 : index
    %c0_11 = arith.constant 0 : index
    %17 = vector.load %arg7[%c28, %c0_11] : memref<112x360xf32, #tpu.memory_space<vmem>>, vector<4x360xf32>
    tpu.vector_store %arg7[%c28, %c0_11], %16 {strides = array<i32>} : memref<112x360xf32, #tpu.memory_space<vmem>>, vector<4x360xf32>,
    %18 = vector.extract_strided_slice %1 {offsets = [0, 42], sizes = [4, 360], strides = [1, 1]} : vector<4x420xf32> to vector<4x360xf32>
    %c32 = arith.constant 32 : index
    %c0_12 = arith.constant 0 : index
    %19 = vector.load %arg7[%c32, %c0_12] : memref<112x360xf32, #tpu.memory_space<vmem>>, vector<4x360xf32>
    tpu.vector_store %arg7[%c32, %c0_12], %18 {strides = array<i32>} : memref<112x360xf32, #tpu.memory_space<vmem>>, vector<4x360xf32>,
    %c0_13 = arith.constant 0 : index
    %c0_14 = arith.constant 0 : index
    %c0_15 = arith.constant 0 : index
    %c0_16 = arith.constant 0 : index
    %20 = vector.load %arg3[%c0_13, %c0_14, %c0_15, %c0_16] : memref<1x1x4x420xf32, #tpu.memory_space<vmem>>, vector<1x1x4x420xf32>
    %21 = vector.shape_cast %20 : vector<1x1x4x420xf32> to vector<4x420xf32>
    %22 = vector.extract_strided_slice %21 {offsets = [0, 0], sizes = [4, 360], strides = [1, 1]} : vector<4x420xf32> to vector<4x360xf32>
    %c36 = arith.constant 36 : index
    %c0_17 = arith.constant 0 : index
    %23 = vector.load %arg7[%c36, %c0_17] : memref<112x360xf32, #tpu.memory_space<vmem>>, vector<4x360xf32>
    tpu.vector_store %arg7[%c36, %c0_17], %22 {strides = array<i32>} : memref<112x360xf32, #tpu.memory_space<vmem>>, vector<4x360xf32>,
    %24 = vector.extract_strided_slice %21 {offsets = [0, 1], sizes = [4, 360], strides = [1, 1]} : vector<4x420xf32> to vector<4x360xf32>
    %c40 = arith.constant 40 : index
    %c0_18 = arith.constant 0 : index
    %25 = vector.load %arg7[%c40, %c0_18] : memref<112x360xf32, #tpu.memory_space<vmem>>, vector<4x360xf32>
    tpu.vector_store %arg7[%c40, %c0_18], %24 {strides = array<i32>} : memref<112x360xf32, #tpu.memory_space<vmem>>, vector<4x360xf32>,
    %26 = vector.extract_strided_slice %21 {offsets = [0, 2], sizes = [4, 360], strides = [1, 1]} : vector<4x420xf32> to vector<4x360xf32>
    %c44 = arith.constant 44 : index
    %c0_19 = arith.constant 0 : index
    %27 = vector.load %arg7[%c44, %c0_19] : memref<112x360xf32, #tpu.memory_space<vmem>>, vector<4x360xf32>
    tpu.vector_store %arg7[%c44, %c0_19], %26 {strides = array<i32>} : memref<112x360xf32, #tpu.memory_space<vmem>>, vector<4x360xf32>,
    %28 = vector.extract_strided_slice %21 {offsets = [0, 20], sizes = [4, 360], strides = [1, 1]} : vector<4x420xf32> to vector<4x360xf32>
    %c48 = arith.constant 48 : index
    %c0_20 = arith.constant 0 : index
    %29 = vector.load %arg7[%c48, %c0_20] : memref<112x360xf32, #tpu.memory_space<vmem>>, vector<4x360xf32>
    tpu.vector_store %arg7[%c48, %c0_20], %28 {strides = array<i32>} : memref<112x360xf32, #tpu.memory_space<vmem>>, vector<4x360xf32>,
    %30 = vector.extract_strided_slice %21 {offsets = [0, 21], sizes = [4, 360], strides = [1, 1]} : vector<4x420xf32> to vector<4x360xf32>
    %c52 = arith.constant 52 : index
    %c0_21 = arith.constant 0 : index
    %31 = vector.load %arg7[%c52, %c0_21] : memref<112x360xf32, #tpu.memory_space<vmem>>, vector<4x360xf32>
    tpu.vector_store %arg7[%c52, %c0_21], %30 {strides = array<i32>} : memref<112x360xf32, #tpu.memory_space<vmem>>, vector<4x360xf32>,
    %32 = vector.extract_strided_slice %21 {offsets = [0, 22], sizes = [4, 360], strides = [1, 1]} : vector<4x420xf32> to vector<4x360xf32>
    %c56 = arith.constant 56 : index
    %c0_22 = arith.constant 0 : index
    %33 = vector.load %arg7[%c56, %c0_22] : memref<112x360xf32, #tpu.memory_space<vmem>>, vector<4x360xf32>
    tpu.vector_store %arg7[%c56, %c0_22], %32 {strides = array<i32>} : memref<112x360xf32, #tpu.memory_space<vmem>>, vector<4x360xf32>,
    %34 = vector.extract_strided_slice %21 {offsets = [0, 40], sizes = [4, 360], strides = [1, 1]} : vector<4x420xf32> to vector<4x360xf32>
    %c60 = arith.constant 60 : index
    %c0_23 = arith.constant 0 : index
    %35 = vector.load %arg7[%c60, %c0_23] : memref<112x360xf32, #tpu.memory_space<vmem>>, vector<4x360xf32>
    tpu.vector_store %arg7[%c60, %c0_23], %34 {strides = array<i32>} : memref<112x360xf32, #tpu.memory_space<vmem>>, vector<4x360xf32>,
    %36 = vector.extract_strided_slice %21 {offsets = [0, 41], sizes = [4, 360], strides = [1, 1]} : vector<4x420xf32> to vector<4x360xf32>
    %c64 = arith.constant 64 : index
    %c0_24 = arith.constant 0 : index
    %37 = vector.load %arg7[%c64, %c0_24] : memref<112x360xf32, #tpu.memory_space<vmem>>, vector<4x360xf32>
    tpu.vector_store %arg7[%c64, %c0_24], %36 {strides = array<i32>} : memref<112x360xf32, #tpu.memory_space<vmem>>, vector<4x360xf32>,
    %38 = vector.extract_strided_slice %21 {offsets = [0, 42], sizes = [4, 360], strides = [1, 1]} : vector<4x420xf32> to vector<4x360xf32>
    %c68 = arith.constant 68 : index
    %c0_25 = arith.constant 0 : index
    %39 = vector.load %arg7[%c68, %c0_25] : memref<112x360xf32, #tpu.memory_space<vmem>>, vector<4x360xf32>
    tpu.vector_store %arg7[%c68, %c0_25], %38 {strides = array<i32>} : memref<112x360xf32, #tpu.memory_space<vmem>>, vector<4x360xf32>,
    %c0_26 = arith.constant 0 : index
    %c0_27 = arith.constant 0 : index
    %c0_28 = arith.constant 0 : index
    %c0_29 = arith.constant 0 : index
    %40 = vector.load %arg4[%c0_26, %c0_27, %c0_28, %c0_29] : memref<1x1x4x420xf32, #tpu.memory_space<vmem>>, vector<1x1x4x420xf32>
    %41 = vector.shape_cast %40 : vector<1x1x4x420xf32> to vector<4x420xf32>
    %42 = vector.extract_strided_slice %41 {offsets = [0, 0], sizes = [4, 360], strides = [1, 1]} : vector<4x420xf32> to vector<4x360xf32>
    %c72 = arith.constant 72 : index
    %c0_30 = arith.constant 0 : index
    %43 = vector.load %arg7[%c72, %c0_30] : memref<112x360xf32, #tpu.memory_space<vmem>>, vector<4x360xf32>
    tpu.vector_store %arg7[%c72, %c0_30], %42 {strides = array<i32>} : memref<112x360xf32, #tpu.memory_space<vmem>>, vector<4x360xf32>,
    %44 = vector.extract_strided_slice %41 {offsets = [0, 1], sizes = [4, 360], strides = [1, 1]} : vector<4x420xf32> to vector<4x360xf32>
    %c76 = arith.constant 76 : index
    %c0_31 = arith.constant 0 : index
    %45 = vector.load %arg7[%c76, %c0_31] : memref<112x360xf32, #tpu.memory_space<vmem>>, vector<4x360xf32>
    tpu.vector_store %arg7[%c76, %c0_31], %44 {strides = array<i32>} : memref<112x360xf32, #tpu.memory_space<vmem>>, vector<4x360xf32>,
    %46 = vector.extract_strided_slice %41 {offsets = [0, 2], sizes = [4, 360], strides = [1, 1]} : vector<4x420xf32> to vector<4x360xf32>
    %c80 = arith.constant 80 : index
    %c0_32 = arith.constant 0 : index
    %47 = vector.load %arg7[%c80, %c0_32] : memref<112x360xf32, #tpu.memory_space<vmem>>, vector<4x360xf32>
    tpu.vector_store %arg7[%c80, %c0_32], %46 {strides = array<i32>} : memref<112x360xf32, #tpu.memory_space<vmem>>, vector<4x360xf32>,
    %48 = vector.extract_strided_slice %41 {offsets = [0, 20], sizes = [4, 360], strides = [1, 1]} : vector<4x420xf32> to vector<4x360xf32>
    %c84 = arith.constant 84 : index
    %c0_33 = arith.constant 0 : index
    %49 = vector.load %arg7[%c84, %c0_33] : memref<112x360xf32, #tpu.memory_space<vmem>>, vector<4x360xf32>
    tpu.vector_store %arg7[%c84, %c0_33], %48 {strides = array<i32>} : memref<112x360xf32, #tpu.memory_space<vmem>>, vector<4x360xf32>,
    %50 = vector.extract_strided_slice %41 {offsets = [0, 21], sizes = [4, 360], strides = [1, 1]} : vector<4x420xf32> to vector<4x360xf32>
    %c88 = arith.constant 88 : index
    %c0_34 = arith.constant 0 : index
    %51 = vector.load %arg7[%c88, %c0_34] : memref<112x360xf32, #tpu.memory_space<vmem>>, vector<4x360xf32>
    tpu.vector_store %arg7[%c88, %c0_34], %50 {strides = array<i32>} : memref<112x360xf32, #tpu.memory_space<vmem>>, vector<4x360xf32>,
    %52 = vector.extract_strided_slice %41 {offsets = [0, 22], sizes = [4, 360], strides = [1, 1]} : vector<4x420xf32> to vector<4x360xf32>
    %c92 = arith.constant 92 : index
    %c0_35 = arith.constant 0 : index
    %53 = vector.load %arg7[%c92, %c0_35] : memref<112x360xf32, #tpu.memory_space<vmem>>, vector<4x360xf32>
    tpu.vector_store %arg7[%c92, %c0_35], %52 {strides = array<i32>} : memref<112x360xf32, #tpu.memory_space<vmem>>, vector<4x360xf32>,
    %54 = vector.extract_strided_slice %41 {offsets = [0, 40], sizes = [4, 360], strides = [1, 1]} : vector<4x420xf32> to vector<4x360xf32>
    %c96 = arith.constant 96 : index
    %c0_36 = arith.constant 0 : index
    %55 = vector.load %arg7[%c96, %c0_36] : memref<112x360xf32, #tpu.memory_space<vmem>>, vector<4x360xf32>
    tpu.vector_store %arg7[%c96, %c0_36], %54 {strides = array<i32>} : memref<112x360xf32, #tpu.memory_space<vmem>>, vector<4x360xf32>,
    %56 = vector.extract_strided_slice %41 {offsets = [0, 41], sizes = [4, 360], strides = [1, 1]} : vector<4x420xf32> to vector<4x360xf32>
    %c100 = arith.constant 100 : index
    %c0_37 = arith.constant 0 : index
    %57 = vector.load %arg7[%c100, %c0_37] : memref<112x360xf32, #tpu.memory_space<vmem>>, vector<4x360xf32>
    tpu.vector_store %arg7[%c100, %c0_37], %56 {strides = array<i32>} : memref<112x360xf32, #tpu.memory_space<vmem>>, vector<4x360xf32>,
    %58 = vector.extract_strided_slice %41 {offsets = [0, 42], sizes = [4, 360], strides = [1, 1]} : vector<4x420xf32> to vector<4x360xf32>
    %c104 = arith.constant 104 : index
    %c0_38 = arith.constant 0 : index
    %59 = vector.load %arg7[%c104, %c0_38] : memref<112x360xf32, #tpu.memory_space<vmem>>, vector<4x360xf32>
    tpu.vector_store %arg7[%c104, %c0_38], %58 {strides = array<i32>} : memref<112x360xf32, #tpu.memory_space<vmem>>, vector<4x360xf32>,
    %cst = arith.constant 1.000000e+00 : f32
    %60 = vector.broadcast %cst : f32 to vector<1x360xf32>
    %c108 = arith.constant 108 : index
    %c0_39 = arith.constant 0 : index
    %61 = vector.load %arg7[%c108, %c0_39] : memref<112x360xf32, #tpu.memory_space<vmem>>, vector<1x360xf32>
    tpu.vector_store %arg7[%c108, %c0_39], %60 {strides = array<i32>} : memref<112x360xf32, #tpu.memory_space<vmem>>, vector<1x360xf32>,
    %cst_40 = arith.constant 0.000000e+00 : f32
    %62 = vector.broadcast %cst_40 : f32 to vector<3x360xf32>
    %c109 = arith.constant 109 : index
    %c0_41 = arith.constant 0 : index
    %63 = vector.load %arg7[%c109, %c0_41] : memref<112x360xf32, #tpu.memory_space<vmem>>, vector<3x360xf32>
    tpu.vector_store %arg7[%c109, %c0_41], %62 {strides = array<i32>} : memref<112x360xf32, #tpu.memory_space<vmem>>, vector<3x360xf32>,
    %c0_42 = arith.constant 0 : index
    %c0_43 = arith.constant 0 : index
    %64 = vector.load %arg5[%c0_42, %c0_43] : memref<8x112xf32, #tpu.memory_space<vmem>>, vector<8x112xf32>
    %c0_44 = arith.constant 0 : index
    %c0_45 = arith.constant 0 : index
    %65 = vector.load %arg7[%c0_44, %c0_45] : memref<112x360xf32, #tpu.memory_space<vmem>>, vector<112x360xf32>
    %cst_46 = arith.constant dense<0.000000e+00> : vector<8x360xf32>
    %66 = tpu.matmul %64, %65, %cst_46 {dimension_numbers = #tpu.dot_dimension_numbers<[1], [0], [0], [1], [0, 0, 1, 1], [], []>} : vector<8x112xf32>, vector<112x360xf32>, vector<8x360xf32> -> vector<8x360xf32>
    %cst_47 = arith.constant 0.000000e+00 : f32
    %67 = vector.broadcast %cst_47 : f32 to vector<8x360xf32>
    %68 = arith.maximumf %66, %67 : vector<8x360xf32>
    %69 = vector.extract_strided_slice %68 {offsets = [0, 0], sizes = [8, 18], strides = [1, 1]} : vector<8x360xf32> to vector<8x18xf32>
    %c0_48 = arith.constant 0 : index
    %c0_49 = arith.constant 0 : index
    %c0_50 = arith.constant 0 : index
    %c0_51 = arith.constant 0 : index
    %c0_52 = arith.constant 0 : index
    %70 = vector.load %arg6[%c0_48, %c0_49, %c0_50, %c0_51, %c0_52] : memref<1x8x1x18x18xf32, #tpu.memory_space<vmem>>, vector<1x8x1x1x18xf32>
    %71 = vector.shape_cast %70 : vector<1x8x1x1x18xf32> to vector<8x18xf32>
    %72 = vector.shape_cast %69 : vector<8x18xf32> to vector<1x8x1x1x18xf32>
    tpu.vector_store %arg6[%c0_48, %c0_49, %c0_50, %c0_51, %c0_52], %72 {strides = array<i32>} : memref<1x8x1x18x18xf32, #tpu.memory_space<vmem>>, vector<1x8x1x1x18xf32>,
    %73 = vector.extract_strided_slice %68 {offsets = [0, 20], sizes = [8, 18], strides = [1, 1]} : vector<8x360xf32> to vector<8x18xf32>
    %c0_53 = arith.constant 0 : index
    %c0_54 = arith.constant 0 : index
    %c0_55 = arith.constant 0 : index
    %c1 = arith.constant 1 : index
    %c0_56 = arith.constant 0 : index
    %74 = vector.load %arg6[%c0_53, %c0_54, %c0_55, %c1, %c0_56] : memref<1x8x1x18x18xf32, #tpu.memory_space<vmem>>, vector<1x8x1x1x18xf32>
    %75 = vector.shape_cast %74 : vector<1x8x1x1x18xf32> to vector<8x18xf32>
    %76 = vector.shape_cast %73 : vector<8x18xf32> to vector<1x8x1x1x18xf32>
    tpu.vector_store %arg6[%c0_53, %c0_54, %c0_55, %c1, %c0_56], %76 {strides = array<i32>} : memref<1x8x1x18x18xf32, #tpu.memory_space<vmem>>, vector<1x8x1x1x18xf32>,
    %77 = vector.extract_strided_slice %68 {offsets = [0, 40], sizes = [8, 18], strides = [1, 1]} : vector<8x360xf32> to vector<8x18xf32>
    %c0_57 = arith.constant 0 : index
    %c0_58 = arith.constant 0 : index
    %c0_59 = arith.constant 0 : index
    %c2 = arith.constant 2 : index
    %c0_60 = arith.constant 0 : index
    %78 = vector.load %arg6[%c0_57, %c0_58, %c0_59, %c2, %c0_60] : memref<1x8x1x18x18xf32, #tpu.memory_space<vmem>>, vector<1x8x1x1x18xf32>
    %79 = vector.shape_cast %78 : vector<1x8x1x1x18xf32> to vector<8x18xf32>
    %80 = vector.shape_cast %77 : vector<8x18xf32> to vector<1x8x1x1x18xf32>
    tpu.vector_store %arg6[%c0_57, %c0_58, %c0_59, %c2, %c0_60], %80 {strides = array<i32>} : memref<1x8x1x18x18xf32, #tpu.memory_space<vmem>>, vector<1x8x1x1x18xf32>,
    %81 = vector.extract_strided_slice %68 {offsets = [0, 60], sizes = [8, 18], strides = [1, 1]} : vector<8x360xf32> to vector<8x18xf32>
    %c0_61 = arith.constant 0 : index
    %c0_62 = arith.constant 0 : index
    %c0_63 = arith.constant 0 : index
    %c3 = arith.constant 3 : index
    %c0_64 = arith.constant 0 : index
    %82 = vector.load %arg6[%c0_61, %c0_62, %c0_63, %c3, %c0_64] : memref<1x8x1x18x18xf32, #tpu.memory_space<vmem>>, vector<1x8x1x1x18xf32>
    %83 = vector.shape_cast %82 : vector<1x8x1x1x18xf32> to vector<8x18xf32>
    %84 = vector.shape_cast %81 : vector<8x18xf32> to vector<1x8x1x1x18xf32>
    tpu.vector_store %arg6[%c0_61, %c0_62, %c0_63, %c3, %c0_64], %84 {strides = array<i32>} : memref<1x8x1x18x18xf32, #tpu.memory_space<vmem>>, vector<1x8x1x1x18xf32>,
    %85 = vector.extract_strided_slice %68 {offsets = [0, 80], sizes = [8, 18], strides = [1, 1]} : vector<8x360xf32> to vector<8x18xf32>
    %c0_65 = arith.constant 0 : index
    %c0_66 = arith.constant 0 : index
    %c0_67 = arith.constant 0 : index
    %c4_68 = arith.constant 4 : index
    %c0_69 = arith.constant 0 : index
    %86 = vector.load %arg6[%c0_65, %c0_66, %c0_67, %c4_68, %c0_69] : memref<1x8x1x18x18xf32, #tpu.memory_space<vmem>>, vector<1x8x1x1x18xf32>
    %87 = vector.shape_cast %86 : vector<1x8x1x1x18xf32> to vector<8x18xf32>
    %88 = vector.shape_cast %85 : vector<8x18xf32> to vector<1x8x1x1x18xf32>
    tpu.vector_store %arg6[%c0_65, %c0_66, %c0_67, %c4_68, %c0_69], %88 {strides = array<i32>} : memref<1x8x1x18x18xf32, #tpu.memory_space<vmem>>, vector<1x8x1x1x18xf32>,
    %89 = vector.extract_strided_slice %68 {offsets = [0, 100], sizes = [8, 18], strides = [1, 1]} : vector<8x360xf32> to vector<8x18xf32>
    %c0_70 = arith.constant 0 : index
    %c0_71 = arith.constant 0 : index
    %c0_72 = arith.constant 0 : index
    %c5 = arith.constant 5 : index
    %c0_73 = arith.constant 0 : index
    %90 = vector.load %arg6[%c0_70, %c0_71, %c0_72, %c5, %c0_73] : memref<1x8x1x18x18xf32, #tpu.memory_space<vmem>>, vector<1x8x1x1x18xf32>
    %91 = vector.shape_cast %90 : vector<1x8x1x1x18xf32> to vector<8x18xf32>
    %92 = vector.shape_cast %89 : vector<8x18xf32> to vector<1x8x1x1x18xf32>
    tpu.vector_store %arg6[%c0_70, %c0_71, %c0_72, %c5, %c0_73], %92 {strides = array<i32>} : memref<1x8x1x18x18xf32, #tpu.memory_space<vmem>>, vector<1x8x1x1x18xf32>,
    %93 = vector.extract_strided_slice %68 {offsets = [0, 120], sizes = [8, 18], strides = [1, 1]} : vector<8x360xf32> to vector<8x18xf32>
    %c0_74 = arith.constant 0 : index
    %c0_75 = arith.constant 0 : index
    %c0_76 = arith.constant 0 : index
    %c6 = arith.constant 6 : index
    %c0_77 = arith.constant 0 : index
    %94 = vector.load %arg6[%c0_74, %c0_75, %c0_76, %c6, %c0_77] : memref<1x8x1x18x18xf32, #tpu.memory_space<vmem>>, vector<1x8x1x1x18xf32>
    %95 = vector.shape_cast %94 : vector<1x8x1x1x18xf32> to vector<8x18xf32>
    %96 = vector.shape_cast %93 : vector<8x18xf32> to vector<1x8x1x1x18xf32>
    tpu.vector_store %arg6[%c0_74, %c0_75, %c0_76, %c6, %c0_77], %96 {strides = array<i32>} : memref<1x8x1x18x18xf32, #tpu.memory_space<vmem>>, vector<1x8x1x1x18xf32>,
    %97 = vector.extract_strided_slice %68 {offsets = [0, 140], sizes = [8, 18], strides = [1, 1]} : vector<8x360xf32> to vector<8x18xf32>
    %c0_78 = arith.constant 0 : index
    %c0_79 = arith.constant 0 : index
    %c0_80 = arith.constant 0 : index
    %c7 = arith.constant 7 : index
    %c0_81 = arith.constant 0 : index
    %98 = vector.load %arg6[%c0_78, %c0_79, %c0_80, %c7, %c0_81] : memref<1x8x1x18x18xf32, #tpu.memory_space<vmem>>, vector<1x8x1x1x18xf32>
    %99 = vector.shape_cast %98 : vector<1x8x1x1x18xf32> to vector<8x18xf32>
    %100 = vector.shape_cast %97 : vector<8x18xf32> to vector<1x8x1x1x18xf32>
    tpu.vector_store %arg6[%c0_78, %c0_79, %c0_80, %c7, %c0_81], %100 {strides = array<i32>} : memref<1x8x1x18x18xf32, #tpu.memory_space<vmem>>, vector<1x8x1x1x18xf32>,
    %101 = vector.extract_strided_slice %68 {offsets = [0, 160], sizes = [8, 18], strides = [1, 1]} : vector<8x360xf32> to vector<8x18xf32>
    %c0_82 = arith.constant 0 : index
    %c0_83 = arith.constant 0 : index
    %c0_84 = arith.constant 0 : index
    %c8_85 = arith.constant 8 : index
    %c0_86 = arith.constant 0 : index
    %102 = vector.load %arg6[%c0_82, %c0_83, %c0_84, %c8_85, %c0_86] : memref<1x8x1x18x18xf32, #tpu.memory_space<vmem>>, vector<1x8x1x1x18xf32>
    %103 = vector.shape_cast %102 : vector<1x8x1x1x18xf32> to vector<8x18xf32>
    %104 = vector.shape_cast %101 : vector<8x18xf32> to vector<1x8x1x1x18xf32>
    tpu.vector_store %arg6[%c0_82, %c0_83, %c0_84, %c8_85, %c0_86], %104 {strides = array<i32>} : memref<1x8x1x18x18xf32, #tpu.memory_space<vmem>>, vector<1x8x1x1x18xf32>,
    %105 = vector.extract_strided_slice %68 {offsets = [0, 180], sizes = [8, 18], strides = [1, 1]} : vector<8x360xf32> to vector<8x18xf32>
    %c0_87 = arith.constant 0 : index
    %c0_88 = arith.constant 0 : index
    %c0_89 = arith.constant 0 : index
    %c9 = arith.constant 9 : index
    %c0_90 = arith.constant 0 : index
    %106 = vector.load %arg6[%c0_87, %c0_88, %c0_89, %c9, %c0_90] : memref<1x8x1x18x18xf32, #tpu.memory_space<vmem>>, vector<1x8x1x1x18xf32>
    %107 = vector.shape_cast %106 : vector<1x8x1x1x18xf32> to vector<8x18xf32>
    %108 = vector.shape_cast %105 : vector<8x18xf32> to vector<1x8x1x1x18xf32>
    tpu.vector_store %arg6[%c0_87, %c0_88, %c0_89, %c9, %c0_90], %108 {strides = array<i32>} : memref<1x8x1x18x18xf32, #tpu.memory_space<vmem>>, vector<1x8x1x1x18xf32>,
    %109 = vector.extract_strided_slice %68 {offsets = [0, 200], sizes = [8, 18], strides = [1, 1]} : vector<8x360xf32> to vector<8x18xf32>
    %c0_91 = arith.constant 0 : index
    %c0_92 = arith.constant 0 : index
    %c0_93 = arith.constant 0 : index
    %c10 = arith.constant 10 : index
    %c0_94 = arith.constant 0 : index
    %110 = vector.load %arg6[%c0_91, %c0_92, %c0_93, %c10, %c0_94] : memref<1x8x1x18x18xf32, #tpu.memory_space<vmem>>, vector<1x8x1x1x18xf32>
    %111 = vector.shape_cast %110 : vector<1x8x1x1x18xf32> to vector<8x18xf32>
    %112 = vector.shape_cast %109 : vector<8x18xf32> to vector<1x8x1x1x18xf32>
    tpu.vector_store %arg6[%c0_91, %c0_92, %c0_93, %c10, %c0_94], %112 {strides = array<i32>} : memref<1x8x1x18x18xf32, #tpu.memory_space<vmem>>, vector<1x8x1x1x18xf32>,
    %113 = vector.extract_strided_slice %68 {offsets = [0, 220], sizes = [8, 18], strides = [1, 1]} : vector<8x360xf32> to vector<8x18xf32>
    %c0_95 = arith.constant 0 : index
    %c0_96 = arith.constant 0 : index
    %c0_97 = arith.constant 0 : index
    %c11 = arith.constant 11 : index
    %c0_98 = arith.constant 0 : index
    %114 = vector.load %arg6[%c0_95, %c0_96, %c0_97, %c11, %c0_98] : memref<1x8x1x18x18xf32, #tpu.memory_space<vmem>>, vector<1x8x1x1x18xf32>
    %115 = vector.shape_cast %114 : vector<1x8x1x1x18xf32> to vector<8x18xf32>
    %116 = vector.shape_cast %113 : vector<8x18xf32> to vector<1x8x1x1x18xf32>
    tpu.vector_store %arg6[%c0_95, %c0_96, %c0_97, %c11, %c0_98], %116 {strides = array<i32>} : memref<1x8x1x18x18xf32, #tpu.memory_space<vmem>>, vector<1x8x1x1x18xf32>,
    %117 = vector.extract_strided_slice %68 {offsets = [0, 240], sizes = [8, 18], strides = [1, 1]} : vector<8x360xf32> to vector<8x18xf32>
    %c0_99 = arith.constant 0 : index
    %c0_100 = arith.constant 0 : index
    %c0_101 = arith.constant 0 : index
    %c12_102 = arith.constant 12 : index
    %c0_103 = arith.constant 0 : index
    %118 = vector.load %arg6[%c0_99, %c0_100, %c0_101, %c12_102, %c0_103] : memref<1x8x1x18x18xf32, #tpu.memory_space<vmem>>, vector<1x8x1x1x18xf32>
    %119 = vector.shape_cast %118 : vector<1x8x1x1x18xf32> to vector<8x18xf32>
    %120 = vector.shape_cast %117 : vector<8x18xf32> to vector<1x8x1x1x18xf32>
    tpu.vector_store %arg6[%c0_99, %c0_100, %c0_101, %c12_102, %c0_103], %120 {strides = array<i32>} : memref<1x8x1x18x18xf32, #tpu.memory_space<vmem>>, vector<1x8x1x1x18xf32>,
    %121 = vector.extract_strided_slice %68 {offsets = [0, 260], sizes = [8, 18], strides = [1, 1]} : vector<8x360xf32> to vector<8x18xf32>
    %c0_104 = arith.constant 0 : index
    %c0_105 = arith.constant 0 : index
    %c0_106 = arith.constant 0 : index
    %c13 = arith.constant 13 : index
    %c0_107 = arith.constant 0 : index
    %122 = vector.load %arg6[%c0_104, %c0_105, %c0_106, %c13, %c0_107] : memref<1x8x1x18x18xf32, #tpu.memory_space<vmem>>, vector<1x8x1x1x18xf32>
    %123 = vector.shape_cast %122 : vector<1x8x1x1x18xf32> to vector<8x18xf32>
    %124 = vector.shape_cast %121 : vector<8x18xf32> to vector<1x8x1x1x18xf32>
    tpu.vector_store %arg6[%c0_104, %c0_105, %c0_106, %c13, %c0_107], %124 {strides = array<i32>} : memref<1x8x1x18x18xf32, #tpu.memory_space<vmem>>, vector<1x8x1x1x18xf32>,
    %125 = vector.extract_strided_slice %68 {offsets = [0, 280], sizes = [8, 18], strides = [1, 1]} : vector<8x360xf32> to vector<8x18xf32>
    %c0_108 = arith.constant 0 : index
    %c0_109 = arith.constant 0 : index
    %c0_110 = arith.constant 0 : index
    %c14 = arith.constant 14 : index
    %c0_111 = arith.constant 0 : index
    %126 = vector.load %arg6[%c0_108, %c0_109, %c0_110, %c14, %c0_111] : memref<1x8x1x18x18xf32, #tpu.memory_space<vmem>>, vector<1x8x1x1x18xf32>
    %127 = vector.shape_cast %126 : vector<1x8x1x1x18xf32> to vector<8x18xf32>
    %128 = vector.shape_cast %125 : vector<8x18xf32> to vector<1x8x1x1x18xf32>
    tpu.vector_store %arg6[%c0_108, %c0_109, %c0_110, %c14, %c0_111], %128 {strides = array<i32>} : memref<1x8x1x18x18xf32, #tpu.memory_space<vmem>>, vector<1x8x1x1x18xf32>,
    %129 = vector.extract_strided_slice %68 {offsets = [0, 300], sizes = [8, 18], strides = [1, 1]} : vector<8x360xf32> to vector<8x18xf32>
    %c0_112 = arith.constant 0 : index
    %c0_113 = arith.constant 0 : index
    %c0_114 = arith.constant 0 : index
    %c15 = arith.constant 15 : index
    %c0_115 = arith.constant 0 : index
    %130 = vector.load %arg6[%c0_112, %c0_113, %c0_114, %c15, %c0_115] : memref<1x8x1x18x18xf32, #tpu.memory_space<vmem>>, vector<1x8x1x1x18xf32>
    %131 = vector.shape_cast %130 : vector<1x8x1x1x18xf32> to vector<8x18xf32>
    %132 = vector.shape_cast %129 : vector<8x18xf32> to vector<1x8x1x1x18xf32>
    tpu.vector_store %arg6[%c0_112, %c0_113, %c0_114, %c15, %c0_115], %132 {strides = array<i32>} : memref<1x8x1x18x18xf32, #tpu.memory_space<vmem>>, vector<1x8x1x1x18xf32>,
    %133 = vector.extract_strided_slice %68 {offsets = [0, 320], sizes = [8, 18], strides = [1, 1]} : vector<8x360xf32> to vector<8x18xf32>
    %c0_116 = arith.constant 0 : index
    %c0_117 = arith.constant 0 : index
    %c0_118 = arith.constant 0 : index
    %c16_119 = arith.constant 16 : index
    %c0_120 = arith.constant 0 : index
    %134 = vector.load %arg6[%c0_116, %c0_117, %c0_118, %c16_119, %c0_120] : memref<1x8x1x18x18xf32, #tpu.memory_space<vmem>>, vector<1x8x1x1x18xf32>
    %135 = vector.shape_cast %134 : vector<1x8x1x1x18xf32> to vector<8x18xf32>
    %136 = vector.shape_cast %133 : vector<8x18xf32> to vector<1x8x1x1x18xf32>
    tpu.vector_store %arg6[%c0_116, %c0_117, %c0_118, %c16_119, %c0_120], %136 {strides = array<i32>} : memref<1x8x1x18x18xf32, #tpu.memory_space<vmem>>, vector<1x8x1x1x18xf32>,
    %137 = vector.extract_strided_slice %68 {offsets = [0, 340], sizes = [8, 18], strides = [1, 1]} : vector<8x360xf32> to vector<8x18xf32>
    %c0_121 = arith.constant 0 : index
    %c0_122 = arith.constant 0 : index
    %c0_123 = arith.constant 0 : index
    %c17 = arith.constant 17 : index
    %c0_124 = arith.constant 0 : index
    %138 = vector.load %arg6[%c0_121, %c0_122, %c0_123, %c17, %c0_124] : memref<1x8x1x18x18xf32, #tpu.memory_space<vmem>>, vector<1x8x1x1x18xf32>
    %139 = vector.shape_cast %138 : vector<1x8x1x1x18xf32> to vector<8x18xf32>
    %140 = vector.shape_cast %137 : vector<8x18xf32> to vector<1x8x1x1x18xf32>
    tpu.vector_store %arg6[%c0_121, %c0_122, %c0_123, %c17, %c0_124], %140 {strides = array<i32>} : memref<1x8x1x18x18xf32, #tpu.memory_space<vmem>>, vector<1x8x1x1x18xf32>,
    return
  }
  func.func @transform_0(%arg0: i32, %arg1: i32) -> (i32, i32, i32, i32) {
    %c0_i32 = arith.constant 0 : i32
    %0 = arith.addi %arg1, %c0_i32 : i32
    %c0_i32_0 = arith.constant 0 : i32
    %c0_i32_1 = arith.constant 0 : i32
    %c0_i32_2 = arith.constant 0 : i32
    return %arg0, %0, %c0_i32_0, %c0_i32_1 : i32, i32, i32, i32
  }
  func.func @transform_1(%arg0: i32, %arg1: i32) -> (i32, i32, i32, i32) {
    %c1_i32 = arith.constant 1 : i32
    %0 = arith.addi %arg1, %c1_i32 : i32
    %c0_i32 = arith.constant 0 : i32
    %c0_i32_0 = arith.constant 0 : i32
    %c0_i32_1 = arith.constant 0 : i32
    return %arg0, %0, %c0_i32, %c0_i32_0 : i32, i32, i32, i32
  }
  func.func @transform_2(%arg0: i32, %arg1: i32) -> (i32, i32, i32, i32) {
    %c2_i32 = arith.constant 2 : i32
    %0 = arith.addi %arg1, %c2_i32 : i32
    %c0_i32 = arith.constant 0 : i32
    %c0_i32_0 = arith.constant 0 : i32
    %c0_i32_1 = arith.constant 0 : i32
    return %arg0, %0, %c0_i32, %c0_i32_0 : i32, i32, i32, i32
  }
  func.func @transform_3(%arg0: i32, %arg1: i32) -> (i32, i32) {
    %c0_i32 = arith.constant 0 : i32
    %c0_i32_0 = arith.constant 0 : i32
    %c0_i32_1 = arith.constant 0 : i32
    return %c0_i32, %c0_i32_0 : i32, i32
  }
  func.func @transform_4(%arg0: i32, %arg1: i32) -> (i32, i32, i32, i32, i32) {
    %c0_i32 = arith.constant 0 : i32
    %c0_i32_0 = arith.constant 0 : i32
    %c0_i32_1 = arith.constant 0 : i32
    %c0_i32_2 = arith.constant 0 : i32
    return %arg0, %c0_i32, %arg1, %c0_i32_0, %c0_i32_1 : i32, i32, i32, i32, i32
  }
}

</mosaic_0001>

<llo_original>
// kernel: conv_transpose_block_3d.1
$region0: #{conv_transpose_block_3d.1}
  #allocation0 [shape = 'u32[]', space=smem, size = 0x4, offset = 0x4, fixed_abs, tag = 'smem constant byte address 0x4 - core index']
  #allocation1 [shape = 'u32[144,128]{1,0:T(1,128)}', space=vmem, size = 0x12000, scoped, tag = 'internal scratch']
  #allocation2 [shape = 'f32[112,360]{1,0:T(8,128)}', space=vmem, size = 0x2a000, scoped, tag = 'scratch operand']
  %s0 = inlined_call_operand.vmem [shape: f32[2,20,4,420], index: 0, kind: input, shape index: {}, may-alias: {0,1,2}]
  %s1 = inlined_call_operand.vmem [shape: f32[2,20,4,420], index: 1, kind: input, shape index: {}, may-alias: {0,1,2}]
  %s2 = inlined_call_operand.vmem [shape: f32[2,20,4,420], index: 2, kind: input, shape index: {}, may-alias: {0,1,2}]
  %s3 = inlined_call_operand.vmem [shape: f32[8,112], index: 3, kind: input, shape index: {}]
  %s4 = inlined_call_operand.vmem [shape: f32[2,8,18,18,18], index: 4, kind: output, shape index: {}]
  %s5 = sld [smem:[#allocation0]]
  $region83: #{conv_transpose_block_3d.1} parent=0
    _
  %s7 = ssub.s32 1, %s5
  %s8 = scalar_select 0, %s7, %s5
  $region1: #{conv_transpose_block_3d.1} parent=0
    #allocation3 [shape = 'u8[196608]{0}', space=vmem, size = 0x30000, scoped, tag = 'output window, operand 0']
    loop: start=0, step=1, limit=38
    $region2: #{conv_transpose_block_3d.1} parent=1 // loop_pre_header
      _
    $region3: #{conv_transpose_block_3d.1} parent=1 // loop_header
      %s10 = sphi 0, %s14
      %p11 = scmp.ge.s32.totalorder %s10, 38
      %s17 = sphi 0, %s29
      %s18 = sphi 0, %s25
      %s19 = sphi 0, %s17
      %s20 = sphi 0, %s18
      %s21 = sphi 0, %s19
      %s22 = sphi 0, %s20
      %s34 = sphi 0, %s36
      %s37 = sphi 0, %s34
      %s38 = sphi 0, %s37
      %s54 = sphi 0, %s38
      %s64 = sphi 0, %s66
      %s67 = sphi 0, %s64
      %s68 = sphi 0, %s67
      %s84 = sphi 0, %s68
      %s94 = sphi 0, %s96
      %s97 = sphi 0, %s94
      %s98 = sphi 0, %s97
      %s114 = sphi 0, %s98
      %s118 = sphi 0, %s118
      %s120 = sphi 0, %s118
      %s121 = sphi 0, %s120
      %s135 = sphi 0, %s121
      %s143 = sphi 0, %s145
      %s146 = sphi 0, %s143
      %s147 = sphi 0, %s146
      %s163 = sphi 0, %s147
    $region4: #{conv_transpose_block_3d.1} parent=1 // loop_header_branch
      %13 = sbr.rel (%p11) target = $region8
    $region5: #{conv_transpose_block_3d.1} parent=1 // loop_body
      %s15 = ssub.s32 %s10, 1
      %s16 = ssub.s32 %s10, 2
      %s23 = sadd.s32 1, %s18
      %p24 = scmp.ge.s32.totalorder %s23, 18
      %s25 = scalar_select %p24, 0, %s23
      %s26 = sadd.s32 1, %s17
      %s27 = scalar_select %p24, %s26, %s17
      %p28 = scmp.ge.s32.totalorder %s27, 2
      %s29 = scalar_select %p28, 0, %s27
      %s30 = ssub.s32 %s17, %s29
      %s31 = ssub.s32 %s18, %s25
      %s32 = sor.u32 %s30, %s31
      %p33 = scmp.eq.s32.totalorder %s32, 0
      %s35 = sadd.s32 %s34, 1
      %s36 = scalar_select %p33, %s34, %s35
      %p39 = pneg %p33
      %p40 = scmp.eq.s32.totalorder %s10, 35
      %p41 = por %p39, %p40
      %p42 = scmp.ne.s32.totalorder %s34, %s37
      %p43 = scmp.eq.s32.totalorder %s10, 0
      %p44 = por %p42, %p43
      %p45 = scmp.ne.s32.totalorder %s34, %s37
      %p46 = scmp.eq.s32.totalorder %s15, 35
      %p47 = por %p45, %p46
      %p48 = scmp.ne.s32.totalorder %s37, %s38
      %p49 = scmp.eq.s32.totalorder %s15, 0
      %p50 = por %p48, %p49
      %p51 = scmp.ne.s32.totalorder %s37, %s38
      %p52 = scmp.eq.s32.totalorder %s16, 35
      %p53 = por %p51, %p52
      %p55 = scmp.ne.s32.totalorder %s38, %s54
      %p56 = scmp.eq.s32.totalorder %s16, 0
      %p57 = por %p55, %p56
      %s58 = sadd.s32 %s18, 1
      %s59 = sadd.s32 %s25, 1
      %s60 = ssub.s32 %s17, %s29
      %s61 = ssub.s32 %s58, %s59
      %s62 = sor.u32 %s60, %s61
      %p63 = scmp.eq.s32.totalorder %s62, 0
      %s65 = sadd.s32 %s64, 1
      %s66 = scalar_select %p63, %s64, %s65
      %p69 = pneg %p63
      %p70 = scmp.eq.s32.totalorder %s10, 35
      %p71 = por %p69, %p70
      %p72 = scmp.ne.s32.totalorder %s64, %s67
      %p73 = scmp.eq.s32.totalorder %s10, 0
      %p74 = por %p72, %p73
      %p75 = scmp.ne.s32.totalorder %s64, %s67
      %p76 = scmp.eq.s32.totalorder %s15, 35
      %p77 = por %p75, %p76
      %p78 = scmp.ne.s32.totalorder %s67, %s68
      %p79 = scmp.eq.s32.totalorder %s15, 0
      %p80 = por %p78, %p79
      %p81 = scmp.ne.s32.totalorder %s67, %s68
      %p82 = scmp.eq.s32.totalorder %s16, 35
      %p83 = por %p81, %p82
      %p85 = scmp.ne.s32.totalorder %s68, %s84
      %p86 = scmp.eq.s32.totalorder %s16, 0
      %p87 = por %p85, %p86
      %s88 = sadd.s32 %s18, 2
      %s89 = sadd.s32 %s25, 2
      %s90 = ssub.s32 %s17, %s29
      %s91 = ssub.s32 %s88, %s89
      %s92 = sor.u32 %s90, %s91
      %p93 = scmp.eq.s32.totalorder %s92, 0
      %s95 = sadd.s32 %s94, 1
      %s96 = scalar_select %p93, %s94, %s95
      %p99 = pneg %p93
      %p100 = scmp.eq.s32.totalorder %s10, 35
      %p101 = por %p99, %p100
      %p102 = scmp.ne.s32.totalorder %s94, %s97
      %p103 = scmp.eq.s32.totalorder %s10, 0
      %p104 = por %p102, %p103
      %p105 = scmp.ne.s32.totalorder %s94, %s97
      %p106 = scmp.eq.s32.totalorder %s15, 35
      %p107 = por %p105, %p106
      %p108 = scmp.ne.s32.totalorder %s97, %s98
      %p109 = scmp.eq.s32.totalorder %s15, 0
      %p110 = por %p108, %p109
      %p111 = scmp.ne.s32.totalorder %s97, %s98
      %p112 = scmp.eq.s32.totalorder %s16, 35
      %p113 = por %p111, %p112
      %p115 = scmp.ne.s32.totalorder %s98, %s114
      %p116 = scmp.eq.s32.totalorder %s16, 0
      %p117 = por %p115, %p116
      %s119 = sadd.s32 %s118, 1
      %p122 = scmp.eq.s32.totalorder %s10, 35
      %p123 = scmp.ne.s32.totalorder %s118, %s120
      %p124 = scmp.eq.s32.totalorder %s10, 0
      %p125 = por %p123, %p124
      %p126 = scmp.ne.s32.totalorder %s118, %s120
      %p127 = scmp.eq.s32.totalorder %s15, 35
      %p128 = por %p126, %p127
      %p129 = scmp.ne.s32.totalorder %s120, %s121
      %p130 = scmp.eq.s32.totalorder %s15, 0
      %p131 = por %p129, %p130
      %p132 = scmp.ne.s32.totalorder %s120, %s121
      %p133 = scmp.eq.s32.totalorder %s16, 35
      %p134 = por %p132, %p133
      %p136 = scmp.ne.s32.totalorder %s121, %s135
      %p137 = scmp.eq.s32.totalorder %s16, 0
      %p138 = por %p136, %p137
      %s139 = ssub.s32 %s17, %s29
      %s140 = ssub.s32 %s18, %s25
      %s141 = sor.u32 %s139, %s140
      %p142 = scmp.eq.s32.totalorder %s141, 0
      %s144 = sadd.s32 %s143, 1
      %s145 = scalar_select %p142, %s143, %s144
      %p148 = pneg %p142
      %p149 = scmp.eq.s32.totalorder %s10, 35
      %p150 = por %p148, %p149
      %p151 = scmp.ne.s32.totalorder %s143, %s146
      %p152 = scmp.eq.s32.totalorder %s10, 0
      %p153 = por %p151, %p152
      %p154 = scmp.ne.s32.totalorder %s143, %s146
      %p155 = scmp.eq.s32.totalorder %s15, 35
      %p156 = por %p154, %p155
      %p157 = scmp.ne.s32.totalorder %s146, %s147
      %p158 = scmp.eq.s32.totalorder %s15, 0
      %p159 = por %p157, %p158
      %p160 = scmp.ne.s32.totalorder %s146, %s147
      %p161 = scmp.eq.s32.totalorder %s16, 35
      %p162 = por %p160, %p161
      %p164 = scmp.ne.s32.totalorder %s147, %s163
      %p165 = scmp.eq.s32.totalorder %s16, 0
      %p166 = por %p164, %p165
      %p167 = scmp.le.s32.totalorder 1, %s10
      %p168 = scmp.lt.s32.totalorder %s10, 37
      %p169 = pnand %p167, %p168
      %p170 = pneg %p169
      // Predicated region
      $region9: #{conv_transpose_block_3d.1} parent=5 // pred_check
        _
      $region10: #{conv_transpose_block_3d.1} parent=5 // pred_check_branch
        %172 = sbr.rel (%p169) target = $region12
      $region11: #{conv_transpose_block_3d.1} parent=5 // pred_region
        %s173 = ssub.s32 %s10, 1
        // Predicated region
        $region13: #{conv_transpose_block_3d.1} parent=11 // pred_check
          %p174 = pneg %p131
        $region14: #{conv_transpose_block_3d.1} parent=11 // pred_check_branch
          %176 = sbr.rel (%p174) target = $region16
        $region15: #{conv_transpose_block_3d.1} parent=11 // pred_region
          _
        $region16: #{conv_transpose_block_3d.1} parent=11 // pred_fallthru
          _
      $region12: #{conv_transpose_block_3d.1} parent=5 // pred_fallthru
        _
      %p177 = scmp.lt.s32.totalorder %s10, 36
      // Predicated region
      $region17: #{conv_transpose_block_3d.1} parent=5 // pred_check
        %p178 = pneg %p177
      $region18: #{conv_transpose_block_3d.1} parent=5 // pred_check_branch
        %180 = sbr.rel (%p178) target = $region20
      $region19: #{conv_transpose_block_3d.1} parent=5 // pred_region
        // Predicated region
        $region21: #{conv_transpose_block_3d.1} parent=19 // pred_check
          %p181 = pneg %p44
        $region22: #{conv_transpose_block_3d.1} parent=19 // pred_check_branch
          %183 = sbr.rel (%p181) target = $region24
        $region23: #{conv_transpose_block_3d.1} parent=19 // pred_region
          %p184 = scmp.lt.s32.totalorder %s17, 1
          %s185 = scalar_select %p184, %s17, 1
          %p186 = scmp.lt.s32.totalorder %s18, 19
          %s187 = scalar_select %p186, %s18, 19
          %s188 = smul.addr %s187, 4
          %s189 = smul.addr %s185, 80
          %s190 = sadd.s32 %s188, %s189
          %s191 = smul.addr %s190, 4
          %s192 = scalar_lea.vmem %s0, %s191
        $region24: #{conv_transpose_block_3d.1} parent=19 // pred_fallthru
          _
        // Predicated region
        $region25: #{conv_transpose_block_3d.1} parent=19 // pred_check
          %p193 = pneg %p74
        $region26: #{conv_transpose_block_3d.1} parent=19 // pred_check_branch
          %195 = sbr.rel (%p193) target = $region28
        $region27: #{conv_transpose_block_3d.1} parent=19 // pred_region
          %s196 = sadd.s32 %s18, 1
          %p197 = scmp.lt.s32.totalorder %s17, 1
          %s198 = scalar_select %p197, %s17, 1
          %p199 = scmp.lt.s32.totalorder %s196, 19
          %s200 = scalar_select %p199, %s196, 19
          %s201 = smul.addr %s200, 4
          %s202 = smul.addr %s198, 80
          %s203 = sadd.s32 %s201, %s202
          %s204 = smul.addr %s203, 4
          %s205 = scalar_lea.vmem %s1, %s204
          %s206 = sadd.s32 %s18, 1
        $region28: #{conv_transpose_block_3d.1} parent=19 // pred_fallthru
          _
        // Predicated region
        $region29: #{conv_transpose_block_3d.1} parent=19 // pred_check
          %p207 = pneg %p104
        $region30: #{conv_transpose_block_3d.1} parent=19 // pred_check_branch
          %209 = sbr.rel (%p207) target = $region32
        $region31: #{conv_transpose_block_3d.1} parent=19 // pred_region
          %s210 = sadd.s32 %s18, 2
          %p211 = scmp.lt.s32.totalorder %s17, 1
          %s212 = scalar_select %p211, %s17, 1
          %p213 = scmp.lt.s32.totalorder %s210, 19
          %s214 = scalar_select %p213, %s210, 19
          %s215 = smul.addr %s214, 4
          %s216 = smul.addr %s212, 80
          %s217 = sadd.s32 %s215, %s216
          %s218 = smul.addr %s217, 4
          %s219 = scalar_lea.vmem %s2, %s218
          %s220 = sadd.s32 %s18, 2
        $region32: #{conv_transpose_block_3d.1} parent=19 // pred_fallthru
          _
      $region20: #{conv_transpose_block_3d.1} parent=5 // pred_fallthru
        _
      %p221 = scmp.le.s32.totalorder 1, %s10
      %p222 = scmp.lt.s32.totalorder %s10, 37
      %p223 = pnand %p221, %p222
      %p224 = pneg %p223
      // Predicated region
      $region33: #{conv_transpose_block_3d.1} parent=5 // pred_check
        _
      $region34: #{conv_transpose_block_3d.1} parent=5 // pred_check_branch
        %226 = sbr.rel (%p223) target = $region36
      $region35: #{conv_transpose_block_3d.1} parent=5 // pred_region
        %s227 = ssub.s32 %s10, 1
        %p228 = scmp.lt.s32.totalorder %s19, 1
        %s229 = scalar_select %p228, %s19, 1
        %p230 = scmp.lt.s32.totalorder %s20, 19
        %s231 = scalar_select %p230, %s20, 19
        %s232 = smul.addr %s231, 4
        %s233 = smul.addr %s229, 80
        %s234 = sadd.s32 %s232, %s233
        %s235 = smul.addr %s234, 4
        %s236 = scalar_lea.vmem %s0, %s235
        %p237 = pneg %p50
        %p238 = pneg %p47
        %s239 = sadd.s32 %s20, 1
        %p240 = scmp.lt.s32.totalorder %s19, 1
        %s241 = scalar_select %p240, %s19, 1
        %p242 = scmp.lt.s32.totalorder %s239, 19
        %s243 = scalar_select %p242, %s239, 19
        %s244 = smul.addr %s243, 4
        %s245 = smul.addr %s241, 80
        %s246 = sadd.s32 %s244, %s245
        %s247 = smul.addr %s246, 4
        %s248 = scalar_lea.vmem %s1, %s247
        %p249 = pneg %p80
        %p250 = pneg %p77
        %s251 = sadd.s32 %s20, 2
        %p252 = scmp.lt.s32.totalorder %s19, 1
        %s253 = scalar_select %p252, %s19, 1
        %p254 = scmp.lt.s32.totalorder %s251, 19
        %s255 = scalar_select %p254, %s251, 19
        %s256 = smul.addr %s255, 4
        %s257 = smul.addr %s253, 80
        %s258 = sadd.s32 %s256, %s257
        %s259 = smul.addr %s258, 4
        %s260 = scalar_lea.vmem %s2, %s259
        %p261 = pneg %p110
        %p262 = pneg %p107
        %p263 = pneg %p131
        %p264 = pneg %p128
        %p265 = pneg %p159
        %p266 = pneg %p156
        %s267 = sand.u32 %s146, 1
        %s268 = sand.u32 %s146, 1
        %s269 = smul.addr %s268, 192
        %s270 = scalar_lea.vmem [#allocation3], %s269
        %p271 = scmp.lt.s32.totalorder %s19, 1
        %s272 = scalar_select %p271, %s19, 1
        %p273 = scmp.lt.s32.totalorder %s20, 19
        %s274 = scalar_select %p273, %s20, 19
        %s275 = smul.addr %s274, 4
        %s276 = smul.addr %s272, 80
        %s277 = sadd.s32 %s275, %s276
        %s278 = smul.addr %s277, 4
        %s279 = scalar_lea.vmem %s0, %s278
        %s280 = sadd.s32 %s20, 1
        %p281 = scmp.lt.s32.totalorder %s19, 1
        %s282 = scalar_select %p281, %s19, 1
        %p283 = scmp.lt.s32.totalorder %s280, 19
        %s284 = scalar_select %p283, %s280, 19
        %s285 = smul.addr %s284, 4
        %s286 = smul.addr %s282, 80
        %s287 = sadd.s32 %s285, %s286
        %s288 = smul.addr %s287, 4
        %s289 = scalar_lea.vmem %s1, %s288
        %s290 = sadd.s32 %s20, 1
        %s291 = sadd.s32 %s20, 2
        %p292 = scmp.lt.s32.totalorder %s19, 1
        %s293 = scalar_select %p292, %s19, 1
        %p294 = scmp.lt.s32.totalorder %s291, 19
        %s295 = scalar_select %p294, %s291, 19
        %s296 = smul.addr %s295, 4
        %s297 = smul.addr %s293, 80
        %s298 = sadd.s32 %s296, %s297
        %s299 = smul.addr %s298, 4
        %s300 = scalar_lea.vmem %s2, %s299
        %s301 = sadd.s32 %s20, 2
        %v302 = vld [vmem:[%s279] sm:$0xff]
        %v303 = vld [vmem:[%s279 + $0x8] sm:$0xff]
        %v306 = vcombine.high %v302, %v302
        %308 = vst [vmem:[#allocation2] sm:$0xf] %v302
        %309 = vst [vmem:[#allocation2 + $0x8] sm:$0xf] %v306
        %vm310 = vcmask 846848
        %311 = vst.msk [vmem:[#allocation2 + $0x10] sm:$0xf] %vm310, %v303
        %v312 = vcombine.low %v302, %v302
        %v313 = vcombine.low %v303, %v303
        %314 = vrot.lane.b32.xlu0 %v312, 127
        %v315 = vpop.permute.xlu0 %314
        %316 = vrot.lane.b32.xlu0 %v302, 127
        %v317 = vpop.permute.xlu0 %316
        %318 = vrot.lane.b32.xlu0 %v313, 127
        %v319 = vpop.permute.xlu0 %318
        %vm320 = vcmask 1039360
        %v321 = vsel %vm320, %v315, %v317
        %v322 = vsel %vm320, %v317, %v319
        %326 = vst [vmem:[#allocation2] sm:$0xf0] %v321
        %327 = vst [vmem:[#allocation2 + $0x8] sm:$0xf0] %v322
        %vm328 = vcmask 850948
        %329 = vst.msk [vmem:[#allocation2 + $0x10] sm:$0xf0] %vm328, %v319
        %330 = vrot.lane.b32.xlu0 %v302, 126
        %v331 = vpop.permute.xlu0 %330
        %332 = vrot.lane.b32.xlu0 %v306, 126
        %v333 = vpop.permute.xlu0 %332
        %334 = vrot.lane.b32.xlu0 %v303, 126
        %v335 = vpop.permute.xlu0 %334
        %vm336 = vcmask 1031168
        %v337 = vsel %vm336, %v331, %v333
        %v338 = vsel %vm336, %v333, %v335
        %342 = vst [vmem:[#allocation2 + $0x18] sm:$0xf] %v337
        %343 = vst [vmem:[#allocation2 + $0x20] sm:$0xf] %v338
        %344 = vst.msk [vmem:[#allocation2 + $0x28] sm:$0xf] %vm310, %v335
        %345 = vrot.lane.b32.xlu0 %v312, 108
        %v346 = vpop.permute.xlu0 %345
        %347 = vrot.lane.b32.xlu0 %v302, 108
        %v348 = vpop.permute.xlu0 %347
        %349 = vrot.lane.b32.xlu0 %v313, 108
        %v350 = vpop.permute.xlu0 %349
        %vm351 = vcmask 883712
        %v352 = vsel %vm351, %v346, %v348
        %v353 = vsel %vm351, %v348, %v350
        %357 = vst [vmem:[#allocation2 + $0x18] sm:$0xf0] %v352
        %358 = vst [vmem:[#allocation2 + $0x20] sm:$0xf0] %v353
        %359 = vst.msk [vmem:[#allocation2 + $0x28] sm:$0xf0] %vm328, %v350
        %360 = vrot.lane.b32.xlu0 %v302, 107
        %v361 = vpop.permute.xlu0 %360
        %362 = vrot.lane.b32.xlu0 %v306, 107
        %v363 = vpop.permute.xlu0 %362
        %364 = vrot.lane.b32.xlu0 %v303, 107
        %v365 = vpop.permute.xlu0 %364
        %vm366 = vcmask 875520
        %v367 = vsel %vm366, %v361, %v363
        %v368 = vsel %vm366, %v363, %v365
        %372 = vst [vmem:[#allocation2 + $0x30] sm:$0xf] %v367
        %373 = vst [vmem:[#allocation2 + $0x38] sm:$0xf] %v368
        %374 = vst.msk [vmem:[#allocation2 + $0x40] sm:$0xf] %vm310, %v365
        %375 = vrot.lane.b32.xlu0 %v312, 106
        %v376 = vpop.permute.xlu0 %375
        %377 = vrot.lane.b32.xlu0 %v302, 106
        %v378 = vpop.permute.xlu0 %377
        %379 = vrot.lane.b32.xlu0 %v313, 106
        %v380 = vpop.permute.xlu0 %379
        %vm381 = vcmask 867328
        %v382 = vsel %vm381, %v376, %v378
        %v383 = vsel %vm381, %v378, %v380
        %387 = vst [vmem:[#allocation2 + $0x30] sm:$0xf0] %v382
        %388 = vst [vmem:[#allocation2 + $0x38] sm:$0xf0] %v383
        %389 = vst.msk [vmem:[#allocation2 + $0x40] sm:$0xf0] %vm328, %v380
        %v390 = vcombine.high %v303, %v303
        %391 = vrot.lane.b32.xlu0 %v302, 88
        %v392 = vpop.permute.xlu0 %391
        %393 = vrot.lane.b32.xlu0 %v306, 88
        %v394 = vpop.permute.xlu0 %393
        %395 = vrot.lane.b32.xlu0 %v303, 88
        %v396 = vpop.permute.xlu0 %395
        %397 = vrot.lane.b32.xlu0 %v390, 88
        %v398 = vpop.permute.xlu0 %397
        %vm399 = vcmask 719872
        %v400 = vsel %vm399, %v392, %v394
        %v401 = vsel %vm399, %v394, %v396
        %v402 = vsel %vm399, %v396, %v398
        %406 = vst [vmem:[#allocation2 + $0x48] sm:$0xf] %v400
        %407 = vst [vmem:[#allocation2 + $0x50] sm:$0xf] %v401
        %408 = vst.msk [vmem:[#allocation2 + $0x58] sm:$0xf] %vm310, %v402
        %409 = vrot.lane.b32.xlu0 %v312, 87
        %v410 = vpop.permute.xlu0 %409
        %411 = vrot.lane.b32.xlu0 %v302, 87
        %v412 = vpop.permute.xlu0 %411
        %413 = vrot.lane.b32.xlu0 %v313, 87
        %v414 = vpop.permute.xlu0 %413
        %415 = vrot.lane.b32.xlu0 %v303, 87
        %v416 = vpop.permute.xlu0 %415
        %vm417 = vcmask 711680
        %v418 = vsel %vm417, %v410, %v412
        %v419 = vsel %vm417, %v412, %v414
        %v420 = vsel %vm417, %v414, %v416
        %424 = vst [vmem:[#allocation2 + $0x48] sm:$0xf0] %v418
        %425 = vst [vmem:[#allocation2 + $0x50] sm:$0xf0] %v419
        %426 = vst.msk [vmem:[#allocation2 + $0x58] sm:$0xf0] %vm328, %v420
        %427 = vrot.lane.b32.xlu0 %v302, 86
        %v428 = vpop.permute.xlu0 %427
        %429 = vrot.lane.b32.xlu0 %v306, 86
        %v430 = vpop.permute.xlu0 %429
        %431 = vrot.lane.b32.xlu0 %v303, 86
        %v432 = vpop.permute.xlu0 %431
        %433 = vrot.lane.b32.xlu0 %v390, 86
        %v434 = vpop.permute.xlu0 %433
        %vm435 = vcmask 703488
        %v436 = vsel %vm435, %v428, %v430
        %v437 = vsel %vm435, %v430, %v432
        %v438 = vsel %vm435, %v432, %v434
        %442 = vst [vmem:[#allocation2 + $0x60] sm:$0xf] %v436
        %443 = vst [vmem:[#allocation2 + $0x68] sm:$0xf] %v437
        %444 = vst.msk [vmem:[#allocation2 + $0x70] sm:$0xf] %vm310, %v438
        %v445 = vld [vmem:[%s289] sm:$0xff]
        %v446 = vld [vmem:[%s289 + $0x8] sm:$0xff]
        %v449 = vcombine.low %v445, %v445
        %v450 = vcombine.low %v446, %v446
        %453 = vst [vmem:[#allocation2 + $0x60] sm:$0xf0] %v449
        %454 = vst [vmem:[#allocation2 + $0x68] sm:$0xf0] %v445
        %455 = vst.msk [vmem:[#allocation2 + $0x70] sm:$0xf0] %vm328, %v450
        %v456 = vcombine.high %v445, %v445
        %457 = vrot.lane.b32.xlu0 %v445, 127
        %v458 = vpop.permute.xlu0 %457
        %459 = vrot.lane.b32.xlu0 %v456, 127
        %v460 = vpop.permute.xlu0 %459
        %461 = vrot.lane.b32.xlu0 %v446, 127
        %v462 = vpop.permute.xlu0 %461
        %v463 = vsel %vm320, %v458, %v460
        %v464 = vsel %vm320, %v460, %v462
        %468 = vst [vmem:[#allocation2 + $0x78] sm:$0xf] %v463
        %469 = vst [vmem:[#allocation2 + $0x80] sm:$0xf] %v464
        %470 = vst.msk [vmem:[#allocation2 + $0x88] sm:$0xf] %vm310, %v462
        %471 = vrot.lane.b32.xlu0 %v449, 126
        %v472 = vpop.permute.xlu0 %471
        %473 = vrot.lane.b32.xlu0 %v445, 126
        %v474 = vpop.permute.xlu0 %473
        %475 = vrot.lane.b32.xlu0 %v450, 126
        %v476 = vpop.permute.xlu0 %475
        %v477 = vsel %vm336, %v472, %v474
        %v478 = vsel %vm336, %v474, %v476
        %482 = vst [vmem:[#allocation2 + $0x78] sm:$0xf0] %v477
        %483 = vst [vmem:[#allocation2 + $0x80] sm:$0xf0] %v478
        %484 = vst.msk [vmem:[#allocation2 + $0x88] sm:$0xf0] %vm328, %v476
        %485 = vrot.lane.b32.xlu0 %v445, 108
        %v486 = vpop.permute.xlu0 %485
        %487 = vrot.lane.b32.xlu0 %v456, 108
        %v488 = vpop.permute.xlu0 %487
        %489 = vrot.lane.b32.xlu0 %v446, 108
        %v490 = vpop.permute.xlu0 %489
        %v491 = vsel %vm351, %v486, %v488
        %v492 = vsel %vm351, %v488, %v490
        %496 = vst [vmem:[#allocation2 + $0x90] sm:$0xf] %v491
        %497 = vst [vmem:[#allocation2 + $0x98] sm:$0xf] %v492
        %498 = vst.msk [vmem:[#allocation2 + $0xa0] sm:$0xf] %vm310, %v490
        %499 = vrot.lane.b32.xlu0 %v449, 107
        %v500 = vpop.permute.xlu0 %499
        %501 = vrot.lane.b32.xlu0 %v445, 107
        %v502 = vpop.permute.xlu0 %501
        %503 = vrot.lane.b32.xlu0 %v450, 107
        %v504 = vpop.permute.xlu0 %503
        %v505 = vsel %vm366, %v500, %v502
        %v506 = vsel %vm366, %v502, %v504
        %510 = vst [vmem:[#allocation2 + $0x90] sm:$0xf0] %v505
        %511 = vst [vmem:[#allocation2 + $0x98] sm:$0xf0] %v506
        %512 = vst.msk [vmem:[#allocation2 + $0xa0] sm:$0xf0] %vm328, %v504
        %513 = vrot.lane.b32.xlu0 %v445, 106
        %v514 = vpop.permute.xlu0 %513
        %515 = vrot.lane.b32.xlu0 %v456, 106
        %v516 = vpop.permute.xlu0 %515
        %517 = vrot.lane.b32.xlu0 %v446, 106
        %v518 = vpop.permute.xlu0 %517
        %v519 = vsel %vm381, %v514, %v516
        %v520 = vsel %vm381, %v516, %v518
        %524 = vst [vmem:[#allocation2 + $0xa8] sm:$0xf] %v519
        %525 = vst [vmem:[#allocation2 + $0xb0] sm:$0xf] %v520
        %526 = vst.msk [vmem:[#allocation2 + $0xb8] sm:$0xf] %vm310, %v518
        %527 = vrot.lane.b32.xlu0 %v449, 88
        %v528 = vpop.permute.xlu0 %527
        %529 = vrot.lane.b32.xlu0 %v445, 88
        %v530 = vpop.permute.xlu0 %529
        %531 = vrot.lane.b32.xlu0 %v450, 88
        %v532 = vpop.permute.xlu0 %531
        %533 = vrot.lane.b32.xlu0 %v446, 88
        %v534 = vpop.permute.xlu0 %533
        %v535 = vsel %vm399, %v528, %v530
        %v536 = vsel %vm399, %v530, %v532
        %v537 = vsel %vm399, %v532, %v534
        %541 = vst [vmem:[#allocation2 + $0xa8] sm:$0xf0] %v535
        %542 = vst [vmem:[#allocation2 + $0xb0] sm:$0xf0] %v536
        %543 = vst.msk [vmem:[#allocation2 + $0xb8] sm:$0xf0] %vm328, %v537
        %v544 = vcombine.high %v446, %v446
        %545 = vrot.lane.b32.xlu0 %v445, 87
        %v546 = vpop.permute.xlu0 %545
        %547 = vrot.lane.b32.xlu0 %v456, 87
        %v548 = vpop.permute.xlu0 %547
        %549 = vrot.lane.b32.xlu0 %v446, 87
        %v550 = vpop.permute.xlu0 %549
        %551 = vrot.lane.b32.xlu0 %v544, 87
        %v552 = vpop.permute.xlu0 %551
        %v553 = vsel %vm417, %v546, %v548
        %v554 = vsel %vm417, %v548, %v550
        %v555 = vsel %vm417, %v550, %v552
        %559 = vst [vmem:[#allocation2 + $0xc0] sm:$0xf] %v553
        %560 = vst [vmem:[#allocation2 + $0xc8] sm:$0xf] %v554
        %561 = vst.msk [vmem:[#allocation2 + $0xd0] sm:$0xf] %vm310, %v555
        %562 = vrot.lane.b32.xlu0 %v449, 86
        %v563 = vpop.permute.xlu0 %562
        %564 = vrot.lane.b32.xlu0 %v445, 86
        %v565 = vpop.permute.xlu0 %564
        %566 = vrot.lane.b32.xlu0 %v450, 86
        %v567 = vpop.permute.xlu0 %566
        %568 = vrot.lane.b32.xlu0 %v446, 86
        %v569 = vpop.permute.xlu0 %568
        %v570 = vsel %vm435, %v563, %v565
        %v571 = vsel %vm435, %v565, %v567
        %v572 = vsel %vm435, %v567, %v569
        %576 = vst [vmem:[#allocation2 + $0xc0] sm:$0xf0] %v570
        %577 = vst [vmem:[#allocation2 + $0xc8] sm:$0xf0] %v571
        %578 = vst.msk [vmem:[#allocation2 + $0xd0] sm:$0xf0] %vm328, %v572
        %v579 = vld [vmem:[%s300] sm:$0xff]
        %v580 = vld [vmem:[%s300 + $0x8] sm:$0xff]
        %v583 = vcombine.high %v579, %v579
        %585 = vst [vmem:[#allocation2 + $0xd8] sm:$0xf] %v579
        %586 = vst [vmem:[#allocation2 + $0xe0] sm:$0xf] %v583
        %587 = vst.msk [vmem:[#allocation2 + $0xe8] sm:$0xf] %vm310, %v580
        %v588 = vcombine.low %v579, %v579
        %v589 = vcombine.low %v580, %v580
        %590 = vrot.lane.b32.xlu0 %v588, 127
        %v591 = vpop.permute.xlu0 %590
        %592 = vrot.lane.b32.xlu0 %v579, 127
        %v593 = vpop.permute.xlu0 %592
        %594 = vrot.lane.b32.xlu0 %v589, 127
        %v595 = vpop.permute.xlu0 %594
        %v596 = vsel %vm320, %v591, %v593
        %v597 = vsel %vm320, %v593, %v595
        %601 = vst [vmem:[#allocation2 + $0xd8] sm:$0xf0] %v596
        %602 = vst [vmem:[#allocation2 + $0xe0] sm:$0xf0] %v597
        %603 = vst.msk [vmem:[#allocation2 + $0xe8] sm:$0xf0] %vm328, %v595
        %604 = vrot.lane.b32.xlu0 %v579, 126
        %v605 = vpop.permute.xlu0 %604
        %606 = vrot.lane.b32.xlu0 %v583, 126
        %v607 = vpop.permute.xlu0 %606
        %608 = vrot.lane.b32.xlu0 %v580, 126
        %v609 = vpop.permute.xlu0 %608
        %v610 = vsel %vm336, %v605, %v607
        %v611 = vsel %vm336, %v607, %v609
        %615 = vst [vmem:[#allocation2 + $0xf0] sm:$0xf] %v610
        %616 = vst [vmem:[#allocation2 + $0xf8] sm:$0xf] %v611
        %617 = vst.msk [vmem:[#allocation2 + $0x100] sm:$0xf] %vm310, %v609
        %618 = vrot.lane.b32.xlu0 %v588, 108
        %v619 = vpop.permute.xlu0 %618
        %620 = vrot.lane.b32.xlu0 %v579, 108
        %v621 = vpop.permute.xlu0 %620
        %622 = vrot.lane.b32.xlu0 %v589, 108
        %v623 = vpop.permute.xlu0 %622
        %v624 = vsel %vm351, %v619, %v621
        %v625 = vsel %vm351, %v621, %v623
        %629 = vst [vmem:[#allocation2 + $0xf0] sm:$0xf0] %v624
        %630 = vst [vmem:[#allocation2 + $0xf8] sm:$0xf0] %v625
        %631 = vst.msk [vmem:[#allocation2 + $0x100] sm:$0xf0] %vm328, %v623
        %632 = vrot.lane.b32.xlu0 %v579, 107
        %v633 = vpop.permute.xlu0 %632
        %634 = vrot.lane.b32.xlu0 %v583, 107
        %v635 = vpop.permute.xlu0 %634
        %636 = vrot.lane.b32.xlu0 %v580, 107
        %v637 = vpop.permute.xlu0 %636
        %v638 = vsel %vm366, %v633, %v635
        %v639 = vsel %vm366, %v635, %v637
        %643 = vst [vmem:[#allocation2 + $0x108] sm:$0xf] %v638
        %644 = vst [vmem:[#allocation2 + $0x110] sm:$0xf] %v639
        %645 = vst.msk [vmem:[#allocation2 + $0x118] sm:$0xf] %vm310, %v637
        %646 = vrot.lane.b32.xlu0 %v588, 106
        %v647 = vpop.permute.xlu0 %646
        %648 = vrot.lane.b32.xlu0 %v579, 106
        %v649 = vpop.permute.xlu0 %648
        %650 = vrot.lane.b32.xlu0 %v589, 106
        %v651 = vpop.permute.xlu0 %650
        %v652 = vsel %vm381, %v647, %v649
        %v653 = vsel %vm381, %v649, %v651
        %657 = vst [vmem:[#allocation2 + $0x108] sm:$0xf0] %v652
        %658 = vst [vmem:[#allocation2 + $0x110] sm:$0xf0] %v653
        %659 = vst.msk [vmem:[#allocation2 + $0x118] sm:$0xf0] %vm328, %v651
        %v660 = vcombine.high %v580, %v580
        %661 = vrot.lane.b32.xlu0 %v579, 88
        %v662 = vpop.permute.xlu0 %661
        %663 = vrot.lane.b32.xlu0 %v583, 88
        %v664 = vpop.permute.xlu0 %663
        %665 = vrot.lane.b32.xlu0 %v580, 88
        %v666 = vpop.permute.xlu0 %665
        %667 = vrot.lane.b32.xlu0 %v660, 88
        %v668 = vpop.permute.xlu0 %667
        %v669 = vsel %vm399, %v662, %v664
        %v670 = vsel %vm399, %v664, %v666
        %v671 = vsel %vm399, %v666, %v668
        %675 = vst [vmem:[#allocation2 + $0x120] sm:$0xf] %v669
        %676 = vst [vmem:[#allocation2 + $0x128] sm:$0xf] %v670
        %677 = vst.msk [vmem:[#allocation2 + $0x130] sm:$0xf] %vm310, %v671
        %678 = vrot.lane.b32.xlu0 %v588, 87
        %v679 = vpop.permute.xlu0 %678
        %680 = vrot.lane.b32.xlu0 %v579, 87
        %v681 = vpop.permute.xlu0 %680
        %682 = vrot.lane.b32.xlu0 %v589, 87
        %v683 = vpop.permute.xlu0 %682
        %684 = vrot.lane.b32.xlu0 %v580, 87
        %v685 = vpop.permute.xlu0 %684
        %v686 = vsel %vm417, %v679, %v681
        %v687 = vsel %vm417, %v681, %v683
        %v688 = vsel %vm417, %v683, %v685
        %692 = vst [vmem:[#allocation2 + $0x120] sm:$0xf0] %v686
        %693 = vst [vmem:[#allocation2 + $0x128] sm:$0xf0] %v687
        %694 = vst.msk [vmem:[#allocation2 + $0x130] sm:$0xf0] %vm328, %v688
        %695 = vrot.lane.b32.xlu0 %v579, 86
        %v696 = vpop.permute.xlu0 %695
        %697 = vrot.lane.b32.xlu0 %v583, 86
        %v698 = vpop.permute.xlu0 %697
        %699 = vrot.lane.b32.xlu0 %v580, 86
        %v700 = vpop.permute.xlu0 %699
        %701 = vrot.lane.b32.xlu0 %v660, 86
        %v702 = vpop.permute.xlu0 %701
        %v703 = vsel %vm435, %v696, %v698
        %v704 = vsel %vm435, %v698, %v700
        %v705 = vsel %vm435, %v700, %v702
        %709 = vst [vmem:[#allocation2 + $0x138] sm:$0xf] %v703
        %710 = vst [vmem:[#allocation2 + $0x140] sm:$0xf] %v704
        %711 = vst.msk [vmem:[#allocation2 + $0x148] sm:$0xf] %vm310, %v705
        %v712 = vlaneseq
        %vm713 = vcmp.ge.s32.totalorder %v712, 0
        %vm714 = vcmp.lt.s32.totalorder %v712, 360
        %vm715 = vmand %vm713, %vm714
        %s716 = scalar_lea.vmem [#allocation2], 316
        %717 = vst.msk [vmem:[%s716] ss:$8 sm:$0x7] %vm715, 1.0
        %718 = vst.msk [vmem:[%s716] ss:$8 sm:$0x0] %vm715, 1.0
        %719 = vst [vmem:[#allocation2 + $0x138] sm:$0xe0] 0.0
        %720 = vst [vmem:[#allocation2 + $0x140] sm:$0xe0] 0.0
        %vm721 = vcmask 850949
        %722 = vst.msk [vmem:[#allocation2 + $0x148] sm:$0xe0] %vm721, 0.0
        %v723 = vld [vmem:[%s3] sm:$0xff]
        %v724 = vld [vmem:[#allocation2] sm:$0xff]
        %v725 = vld [vmem:[#allocation2 + $0x8] sm:$0xff]
        %v726 = vld [vmem:[#allocation2 + $0x10] sm:$0xff]
        %v727 = vld [vmem:[#allocation2 + $0x18] sm:$0xff]
        %v728 = vld [vmem:[#allocation2 + $0x20] sm:$0xff]
        %v729 = vld [vmem:[#allocation2 + $0x28] sm:$0xff]
        %v730 = vld [vmem:[#allocation2 + $0x30] sm:$0xff]
        %v731 = vld [vmem:[#allocation2 + $0x38] sm:$0xff]
        %v732 = vld [vmem:[#allocation2 + $0x40] sm:$0xff]
        %v733 = vld [vmem:[#allocation2 + $0x48] sm:$0xff]
        %v734 = vld [vmem:[#allocation2 + $0x50] sm:$0xff]
        %v735 = vld [vmem:[#allocation2 + $0x58] sm:$0xff]
        %v736 = vld [vmem:[#allocation2 + $0x60] sm:$0xff]
        %v737 = vld [vmem:[#allocation2 + $0x68] sm:$0xff]
        %v738 = vld [vmem:[#allocation2 + $0x70] sm:$0xff]
        %v739 = vld [vmem:[#allocation2 + $0x78] sm:$0xff]
        %v740 = vld [vmem:[#allocation2 + $0x80] sm:$0xff]
        %v741 = vld [vmem:[#allocation2 + $0x88] sm:$0xff]
        %v742 = vld [vmem:[#allocation2 + $0x90] sm:$0xff]
        %v743 = vld [vmem:[#allocation2 + $0x98] sm:$0xff]
        %v744 = vld [vmem:[#allocation2 + $0xa0] sm:$0xff]
        %v745 = vld [vmem:[#allocation2 + $0xa8] sm:$0xff]
        %v746 = vld [vmem:[#allocation2 + $0xb0] sm:$0xff]
        %v747 = vld [vmem:[#allocation2 + $0xb8] sm:$0xff]
        %v748 = vld [vmem:[#allocation2 + $0xc0] sm:$0xff]
        %v749 = vld [vmem:[#allocation2 + $0xc8] sm:$0xff]
        %v750 = vld [vmem:[#allocation2 + $0xd0] sm:$0xff]
        %v751 = vld [vmem:[#allocation2 + $0xd8] sm:$0xff]
        %v752 = vld [vmem:[#allocation2 + $0xe0] sm:$0xff]
        %v753 = vld [vmem:[#allocation2 + $0xe8] sm:$0xff]
        %v754 = vld [vmem:[#allocation2 + $0xf0] sm:$0xff]
        %v755 = vld [vmem:[#allocation2 + $0xf8] sm:$0xff]
        %v756 = vld [vmem:[#allocation2 + $0x100] sm:$0xff]
        %v757 = vld [vmem:[#allocation2 + $0x108] sm:$0xff]
        %v758 = vld [vmem:[#allocation2 + $0x110] sm:$0xff]
        %v759 = vld [vmem:[#allocation2 + $0x118] sm:$0xff]
        %v760 = vld [vmem:[#allocation2 + $0x120] sm:$0xff]
        %v761 = vld [vmem:[#allocation2 + $0x128] sm:$0xff]
        %v762 = vld [vmem:[#allocation2 + $0x130] sm:$0xff]
        %v763 = vld [vmem:[#allocation2 + $0x138] sm:$0xff]
        %v764 = vld [vmem:[#allocation2 + $0x140] sm:$0xff]
        %v765 = vld [vmem:[#allocation2 + $0x148] sm:$0xff]
        %vm766 = vcmask 916480
        %v768 = vsel %vm766, %v723, 0
        %770 = vmatprep.subr.mxu0 0.0
        %771 = vmatpush1.msra.mxu0 0.0
        %772 = vmatprep.subr.mxu0 0.0
        %773 = vmatpush1.msra.mxu0 0.0
        %774 = vmatprep.subr.mxu0 %v764
        %775 = vmatpush1.msra.mxu0 %v763
        %776 = vmatprep.subr.mxu0 %v761
        %777 = vmatpush1.msra.mxu0 %v760
        %778 = vmatprep.subr.mxu0 %v758
        %779 = vmatpush1.msra.mxu0 %v757
        %780 = vmatprep.subr.mxu0 %v755
        %781 = vmatpush1.msra.mxu0 %v754
        %782 = vmatprep.subr.mxu0 %v752
        %783 = vmatpush1.msra.mxu0 %v751
        %784 = vmatprep.subr.mxu0 %v749
        %785 = vmatpush1.msra.mxu0 %v748
        %786 = vmatprep.subr.mxu0 %v746
        %787 = vmatpush1.msra.mxu0 %v745
        %788 = vmatprep.subr.mxu0 %v743
        %789 = vmatpush1.msra.mxu0 %v742
        %790 = vmatprep.subr.mxu0 %v740
        %791 = vmatpush1.msra.mxu0 %v739
        %792 = vmatprep.subr.mxu0 %v737
        %793 = vmatpush1.msra.mxu0 %v736
        %794 = vmatprep.subr.mxu0 %v734
        %795 = vmatpush1.msra.mxu0 %v733
        %796 = vmatprep.subr.mxu0 %v731
        %797 = vmatpush1.msra.mxu0 %v730
        %798 = vmatprep.subr.mxu0 %v728
        %799 = vmatpush1.msra.mxu0 %v727
        %800 = vmatprep.subr.mxu0 %v725
        %801 = vmatpush1.msra.mxu0 %v724
        %802 = vmatprep.subr.mxu0 0.0
        %803 = vmatpush2.msra.mxu0 0.0
        %804 = vmatprep.subr.mxu0 0.0
        %805 = vmatpush2.msra.mxu0 0.0
        %806 = vmatprep.subr.mxu0 0.0
        %807 = vmatpush2.msra.mxu0 0.0
        %808 = vmatprep.subr.mxu0 0.0
        %809 = vmatpush2.msra.mxu0 0.0
        %810 = vmatprep.subr.mxu0 0.0
        %811 = vmatpush2.msra.mxu0 0.0
        %812 = vmatprep.subr.mxu0 0.0
        %813 = vmatpush2.msra.mxu0 0.0
        %814 = vmatprep.subr.mxu0 0.0
        %815 = vmatpush2.msra.mxu0 0.0
        %816 = vmatprep.subr.mxu0 0.0
        %817 = vmatpush2.msra.mxu0 0.0
        %818 = vmatprep.subr.mxu0 0.0
        %819 = vmatpush2.msra.mxu0 0.0
        %820 = vmatprep.subr.mxu0 0.0
        %821 = vmatpush2.msra.mxu0 0.0
        %822 = vmatprep.subr.mxu0 0.0
        %823 = vmatpush2.msra.mxu0 0.0
        %824 = vmatprep.subr.mxu0 0.0
        %825 = vmatpush2.msra.mxu0 0.0
        %826 = vmatprep.subr.mxu0 0.0
        %827 = vmatpush2.msra.mxu0 0.0
        %828 = vmatprep.subr.mxu0 0.0
        %829 = vmatpush2.msra.mxu0 0.0
        %830 = vmatprep.subr.mxu0 0.0
        %831 = vmatpush2.msra.mxu0 0.0
        %832 = vmatprep.subr.mxu0 0.0
        %833 = vmatpush2.msra.mxu0 0.0
        %834 = vmatprep.mubr.f32.mxu0 0.0
        %835 = vmatmul.mubr.f32.gmra.mxu0 %v768
        %v836 = vpop.f32.mrf.mxu0
        %v837 = vadd.f32 0.0, %v836
        %v838 = vpop.f32.mrf.mxu0
        %v839 = vadd.f32 0.0, %v838
        %840 = vdwg.mxu0
        %841 = vmatprep.subr.mxu0 0.0
        %842 = vmatpush1.msra.mxu0 0.0
        %843 = vmatprep.subr.mxu0 0.0
        %844 = vmatpush1.msra.mxu0 0.0
        %845 = vmatprep.subr.mxu0 0.0
        %846 = vmatpush1.msra.mxu0 %v765
        %847 = vmatprep.subr.mxu0 0.0
        %848 = vmatpush1.msra.mxu0 %v762
        %849 = vmatprep.subr.mxu0 0.0
        %850 = vmatpush1.msra.mxu0 %v759
        %851 = vmatprep.subr.mxu0 0.0
        %852 = vmatpush1.msra.mxu0 %v756
        %853 = vmatprep.subr.mxu0 0.0
        %854 = vmatpush1.msra.mxu0 %v753
        %855 = vmatprep.subr.mxu0 0.0
        %856 = vmatpush1.msra.mxu0 %v750
        %857 = vmatprep.subr.mxu0 0.0
        %858 = vmatpush1.msra.mxu0 %v747
        %859 = vmatprep.subr.mxu0 0.0
        %860 = vmatpush1.msra.mxu0 %v744
        %861 = vmatprep.subr.mxu0 0.0
        %862 = vmatpush1.msra.mxu0 %v741
        %863 = vmatprep.subr.mxu0 0.0
        %864 = vmatpush1.msra.mxu0 %v738
        %865 = vmatprep.subr.mxu0 0.0
        %866 = vmatpush1.msra.mxu0 %v735
        %867 = vmatprep.subr.mxu0 0.0
        %868 = vmatpush1.msra.mxu0 %v732
        %869 = vmatprep.subr.mxu0 0.0
        %870 = vmatpush1.msra.mxu0 %v729
        %871 = vmatprep.subr.mxu0 0.0
        %872 = vmatpush1.msra.mxu0 %v726
        %873 = vmatprep.subr.mxu0 0.0
        %874 = vmatpush2.msra.mxu0 0.0
        %875 = vmatprep.subr.mxu0 0.0
        %876 = vmatpush2.msra.mxu0 0.0
        %877 = vmatprep.subr.mxu0 0.0
        %878 = vmatpush2.msra.mxu0 0.0
        %879 = vmatprep.subr.mxu0 0.0
        %880 = vmatpush2.msra.mxu0 0.0
        %881 = vmatprep.subr.mxu0 0.0
        %882 = vmatpush2.msra.mxu0 0.0
        %883 = vmatprep.subr.mxu0 0.0
        %884 = vmatpush2.msra.mxu0 0.0
        %885 = vmatprep.subr.mxu0 0.0
        %886 = vmatpush2.msra.mxu0 0.0
        %887 = vmatprep.subr.mxu0 0.0
        %888 = vmatpush2.msra.mxu0 0.0
        %889 = vmatprep.subr.mxu0 0.0
        %890 = vmatpush2.msra.mxu0 0.0
        %891 = vmatprep.subr.mxu0 0.0
        %892 = vmatpush2.msra.mxu0 0.0
        %893 = vmatprep.subr.mxu0 0.0
        %894 = vmatpush2.msra.mxu0 0.0
        %895 = vmatprep.subr.mxu0 0.0
        %896 = vmatpush2.msra.mxu0 0.0
        %897 = vmatprep.subr.mxu0 0.0
        %898 = vmatpush2.msra.mxu0 0.0
        %899 = vmatprep.subr.mxu0 0.0
        %900 = vmatpush2.msra.mxu0 0.0
        %901 = vmatprep.subr.mxu0 0.0
        %902 = vmatpush2.msra.mxu0 0.0
        %903 = vmatprep.subr.mxu0 0.0
        %904 = vmatpush2.msra.mxu0 0.0
        %905 = vmatprep.mubr.f32.mxu0 0.0
        %906 = vmatmul.mubr.f32.gmra.mxu0 %v768
        %v907 = vpop.f32.mrf.mxu0
        %v908 = vadd.f32 0.0, %v907
        %v909 = vpop.f32.mrf.mxu0
        %910 = vdwg.mxu0
        %v911 = vmax.f32 %v837, 0.0
        %v912 = vmax.f32 %v839, 0.0
        %v913 = vmax.f32 %v908, 0.0
        %v915 = vcombine.high %v911, %v911
        %v917 = vunpack.c.l.s4 1966171168
        %v918 = vunpack.c.0.s8 %v917
        %v919 = vlaneseq
        %v920 = vshrl.u32 %v919, 7
        %v921 = vsub.s32 %v918, %v920
        %v922 = vrot.slane %v911, %v921
        %v924 = vunpack.c.l.s4 1966171168
        %v925 = vunpack.c.0.s8 %v924
        %v926 = vlaneseq
        %v927 = vshrl.u32 %v926, 7
        %v928 = vsub.s32 %v925, %v927
        %v929 = vrot.slane %v915, %v928
        %v930 = vcombine.high %v922, %v922
        %v931 = vcombine.high %v929, %v929
        %v933 = vunpack.c.l.s4 1966171168
        %v934 = vunpack.c.0.s8 %v933
        %v935 = vlaneseq
        %v936 = vshrl.u32 %v935, 7
        %v937 = vsub.s32 %v934, %v936
        %v938 = vrot.slane %v922, %v937
        %v940 = vunpack.c.l.s4 1966171168
        %v941 = vunpack.c.0.s8 %v940
        %v942 = vlaneseq
        %v943 = vshrl.u32 %v942, 7
        %v944 = vsub.s32 %v941, %v943
        %v945 = vrot.slane %v929, %v944
        %v947 = vunpack.c.l.s4 1966171168
        %v948 = vunpack.c.0.s8 %v947
        %v949 = vlaneseq
        %v950 = vshrl.u32 %v949, 7
        %v951 = vsub.s32 %v948, %v950
        %v952 = vrot.slane %v930, %v951
        %v954 = vunpack.c.l.s4 1966171168
        %v955 = vunpack.c.0.s8 %v954
        %v956 = vlaneseq
        %v957 = vshrl.u32 %v956, 7
        %v958 = vsub.s32 %v955, %v957
        %v959 = vrot.slane %v931, %v958
        %v960 = vcombine.high %v938, %v938
        %v961 = vcombine.high %v945, %v945
        %v962 = vcombine.high %v952, %v952
        %v963 = vcombine.high %v959, %v959
        %vm972 = vcmask 139264
        %973 = vst.msk [vmem:[%s270] sm:$0x1] %vm972, %v938
        %974 = vst.msk [vmem:[%s270 + $0x18] sm:$0x1] %vm972, %v952
        %975 = vst.msk [vmem:[%s270 + $0x30] sm:$0x1] %vm972, %v960
        %976 = vst.msk [vmem:[%s270 + $0x48] sm:$0x1] %vm972, %v962
        %977 = vst.msk [vmem:[%s270 + $0x60] sm:$0x1] %vm972, %v945
        %978 = vst.msk [vmem:[%s270 + $0x78] sm:$0x1] %vm972, %v959
        %979 = vst.msk [vmem:[%s270 + $0x90] sm:$0x1] %vm972, %v961
        %980 = vst.msk [vmem:[%s270 + $0xa8] sm:$0x1] %vm972, %v963
        %v981 = vlaneseq
        %v982 = vshrl.u32 %v981, 7
        %v983 = vsub.s32 0, %v982
        %v984 = vrot.slane %v938, %v983
        %v985 = vlaneseq
        %v986 = vshrl.u32 %v985, 7
        %v987 = vsub.s32 0, %v986
        %v988 = vrot.slane %v952, %v987
        %v989 = vlaneseq
        %v990 = vshrl.u32 %v989, 7
        %v991 = vsub.s32 0, %v990
        %v992 = vrot.slane %v960, %v991
        %v993 = vlaneseq
        %v994 = vshrl.u32 %v993, 7
        %v995 = vsub.s32 0, %v994
        %v996 = vrot.slane %v962, %v995
        %v997 = vlaneseq
        %v998 = vshrl.u32 %v997, 7
        %v999 = vsub.s32 0, %v998
        %v1000 = vrot.slane %v945, %v999
        %v1001 = vlaneseq
        %v1002 = vshrl.u32 %v1001, 7
        %v1003 = vsub.s32 0, %v1002
        %v1004 = vrot.slane %v959, %v1003
        %v1005 = vlaneseq
        %v1006 = vshrl.u32 %v1005, 7
        %v1007 = vsub.s32 0, %v1006
        %v1008 = vrot.slane %v961, %v1007
        %v1009 = vlaneseq
        %v1010 = vshrl.u32 %v1009, 7
        %v1011 = vsub.s32 0, %v1010
        %v1012 = vrot.slane %v963, %v1011
        %1013 = vrot.lane.b32.xlu0 %v984, 108
        %v1014 = vpop.permute.xlu0 %1013
        %1015 = vrot.lane.b32.xlu0 %v988, 108
        %v1016 = vpop.permute.xlu0 %1015
        %1017 = vrot.lane.b32.xlu0 %v992, 108
        %v1018 = vpop.permute.xlu0 %1017
        %1019 = vrot.lane.b32.xlu0 %v996, 108
        %v1020 = vpop.permute.xlu0 %1019
        %1021 = vrot.lane.b32.xlu0 %v1000, 108
        %v1022 = vpop.permute.xlu0 %1021
        %1023 = vrot.lane.b32.xlu0 %v1004, 108
        %v1024 = vpop.permute.xlu0 %1023
        %1025 = vrot.lane.b32.xlu0 %v1008, 108
        %v1026 = vpop.permute.xlu0 %1025
        %1027 = vrot.lane.b32.xlu0 %v1012, 108
        %v1028 = vpop.permute.xlu0 %1027
        %1037 = vst.msk [vmem:[%s270 + $0x1] sm:$0x1] %vm972, %v1014
        %1038 = vst.msk [vmem:[%s270 + $0x19] sm:$0x1] %vm972, %v1016
        %1039 = vst.msk [vmem:[%s270 + $0x31] sm:$0x1] %vm972, %v1018
        %1040 = vst.msk [vmem:[%s270 + $0x49] sm:$0x1] %vm972, %v1020
        %1041 = vst.msk [vmem:[%s270 + $0x61] sm:$0x1] %vm972, %v1022
        %1042 = vst.msk [vmem:[%s270 + $0x79] sm:$0x1] %vm972, %v1024
        %1043 = vst.msk [vmem:[%s270 + $0x91] sm:$0x1] %vm972, %v1026
        %1044 = vst.msk [vmem:[%s270 + $0xa9] sm:$0x1] %vm972, %v1028
        %1045 = vrot.lane.b32.xlu0 %v984, 88
        %v1046 = vpop.permute.xlu0 %1045
        %1047 = vrot.lane.b32.xlu0 %v988, 88
        %v1048 = vpop.permute.xlu0 %1047
        %1049 = vrot.lane.b32.xlu0 %v992, 88
        %v1050 = vpop.permute.xlu0 %1049
        %1051 = vrot.lane.b32.xlu0 %v996, 88
        %v1052 = vpop.permute.xlu0 %1051
        %1053 = vrot.lane.b32.xlu0 %v1000, 88
        %v1054 = vpop.permute.xlu0 %1053
        %1055 = vrot.lane.b32.xlu0 %v1004, 88
        %v1056 = vpop.permute.xlu0 %1055
        %1057 = vrot.lane.b32.xlu0 %v1008, 88
        %v1058 = vpop.permute.xlu0 %1057
        %1059 = vrot.lane.b32.xlu0 %v1012, 88
        %v1060 = vpop.permute.xlu0 %1059
        %1069 = vst.msk [vmem:[%s270 + $0x2] sm:$0x1] %vm972, %v1046
        %1070 = vst.msk [vmem:[%s270 + $0x1a] sm:$0x1] %vm972, %v1048
        %1071 = vst.msk [vmem:[%s270 + $0x32] sm:$0x1] %vm972, %v1050
        %1072 = vst.msk [vmem:[%s270 + $0x4a] sm:$0x1] %vm972, %v1052
        %1073 = vst.msk [vmem:[%s270 + $0x62] sm:$0x1] %vm972, %v1054
        %1074 = vst.msk [vmem:[%s270 + $0x7a] sm:$0x1] %vm972, %v1056
        %1075 = vst.msk [vmem:[%s270 + $0x92] sm:$0x1] %vm972, %v1058
        %1076 = vst.msk [vmem:[%s270 + $0xaa] sm:$0x1] %vm972, %v1060
        %1077 = vrot.lane.b32.xlu0 %v984, 68
        %v1078 = vpop.permute.xlu0 %1077
        %1079 = vrot.lane.b32.xlu0 %v988, 68
        %v1080 = vpop.permute.xlu0 %1079
        %1081 = vrot.lane.b32.xlu0 %v992, 68
        %v1082 = vpop.permute.xlu0 %1081
        %1083 = vrot.lane.b32.xlu0 %v996, 68
        %v1084 = vpop.permute.xlu0 %1083
        %1085 = vrot.lane.b32.xlu0 %v1000, 68
        %v1086 = vpop.permute.xlu0 %1085
        %1087 = vrot.lane.b32.xlu0 %v1004, 68
        %v1088 = vpop.permute.xlu0 %1087
        %1089 = vrot.lane.b32.xlu0 %v1008, 68
        %v1090 = vpop.permute.xlu0 %1089
        %1091 = vrot.lane.b32.xlu0 %v1012, 68
        %v1092 = vpop.permute.xlu0 %1091
        %1101 = vst.msk [vmem:[%s270 + $0x3] sm:$0x1] %vm972, %v1078
        %1102 = vst.msk [vmem:[%s270 + $0x1b] sm:$0x1] %vm972, %v1080
        %1103 = vst.msk [vmem:[%s270 + $0x33] sm:$0x1] %vm972, %v1082
        %1104 = vst.msk [vmem:[%s270 + $0x4b] sm:$0x1] %vm972, %v1084
        %1105 = vst.msk [vmem:[%s270 + $0x63] sm:$0x1] %vm972, %v1086
        %1106 = vst.msk [vmem:[%s270 + $0x7b] sm:$0x1] %vm972, %v1088
        %1107 = vst.msk [vmem:[%s270 + $0x93] sm:$0x1] %vm972, %v1090
        %1108 = vst.msk [vmem:[%s270 + $0xab] sm:$0x1] %vm972, %v1092
        %1109 = vrot.lane.b32.xlu0 %v984, 48
        %v1110 = vpop.permute.xlu0 %1109
        %1111 = vrot.lane.b32.xlu0 %v988, 48
        %v1112 = vpop.permute.xlu0 %1111
        %1113 = vrot.lane.b32.xlu0 %v992, 48
        %v1114 = vpop.permute.xlu0 %1113
        %1115 = vrot.lane.b32.xlu0 %v996, 48
        %v1116 = vpop.permute.xlu0 %1115
        %1117 = vrot.lane.b32.xlu0 %v1000, 48
        %v1118 = vpop.permute.xlu0 %1117
        %1119 = vrot.lane.b32.xlu0 %v1004, 48
        %v1120 = vpop.permute.xlu0 %1119
        %1121 = vrot.lane.b32.xlu0 %v1008, 48
        %v1122 = vpop.permute.xlu0 %1121
        %1123 = vrot.lane.b32.xlu0 %v1012, 48
        %v1124 = vpop.permute.xlu0 %1123
        %1133 = vst.msk [vmem:[%s270 + $0x4] sm:$0x1] %vm972, %v1110
        %1134 = vst.msk [vmem:[%s270 + $0x1c] sm:$0x1] %vm972, %v1112
        %1135 = vst.msk [vmem:[%s270 + $0x34] sm:$0x1] %vm972, %v1114
        %1136 = vst.msk [vmem:[%s270 + $0x4c] sm:$0x1] %vm972, %v1116
        %1137 = vst.msk [vmem:[%s270 + $0x64] sm:$0x1] %vm972, %v1118
        %1138 = vst.msk [vmem:[%s270 + $0x7c] sm:$0x1] %vm972, %v1120
        %1139 = vst.msk [vmem:[%s270 + $0x94] sm:$0x1] %vm972, %v1122
        %1140 = vst.msk [vmem:[%s270 + $0xac] sm:$0x1] %vm972, %v1124
        %1141 = vrot.lane.b32.xlu0 %v984, 28
        %v1142 = vpop.permute.xlu0 %1141
        %1143 = vrot.lane.b32.xlu0 %v988, 28
        %v1144 = vpop.permute.xlu0 %1143
        %1145 = vrot.lane.b32.xlu0 %v992, 28
        %v1146 = vpop.permute.xlu0 %1145
        %1147 = vrot.lane.b32.xlu0 %v996, 28
        %v1148 = vpop.permute.xlu0 %1147
        %1149 = vrot.lane.b32.xlu0 %v1000, 28
        %v1150 = vpop.permute.xlu0 %1149
        %1151 = vrot.lane.b32.xlu0 %v1004, 28
        %v1152 = vpop.permute.xlu0 %1151
        %1153 = vrot.lane.b32.xlu0 %v1008, 28
        %v1154 = vpop.permute.xlu0 %1153
        %1155 = vrot.lane.b32.xlu0 %v1012, 28
        %v1156 = vpop.permute.xlu0 %1155
        %1165 = vst.msk [vmem:[%s270 + $0x5] sm:$0x1] %vm972, %v1142
        %1166 = vst.msk [vmem:[%s270 + $0x1d] sm:$0x1] %vm972, %v1144
        %1167 = vst.msk [vmem:[%s270 + $0x35] sm:$0x1] %vm972, %v1146
        %1168 = vst.msk [vmem:[%s270 + $0x4d] sm:$0x1] %vm972, %v1148
        %1169 = vst.msk [vmem:[%s270 + $0x65] sm:$0x1] %vm972, %v1150
        %1170 = vst.msk [vmem:[%s270 + $0x7d] sm:$0x1] %vm972, %v1152
        %1171 = vst.msk [vmem:[%s270 + $0x95] sm:$0x1] %vm972, %v1154
        %1172 = vst.msk [vmem:[%s270 + $0xad] sm:$0x1] %vm972, %v1156
        %v1174 = vcombine.low %v911, %v912
        %v1175 = vcombine.high %v911, %v912
        %v1177 = vunpack.c.l.s4 1966171168
        %v1178 = vunpack.c.0.s8 %v1177
        %v1179 = vlaneseq
        %v1180 = vshrl.u32 %v1179, 7
        %v1181 = vsub.s32 %v1178, %v1180
        %v1182 = vrot.slane %v1174, %v1181
        %v1184 = vunpack.c.l.s4 1966171168
        %v1185 = vunpack.c.0.s8 %v1184
        %v1186 = vlaneseq
        %v1187 = vshrl.u32 %v1186, 7
        %v1188 = vsub.s32 %v1185, %v1187
        %v1189 = vrot.slane %v1175, %v1188
        %v1190 = vcombine.high %v1182, %v1182
        %v1191 = vcombine.high %v1189, %v1189
        %v1193 = vunpack.c.l.s4 1966171168
        %v1194 = vunpack.c.0.s8 %v1193
        %v1195 = vlaneseq
        %v1196 = vshrl.u32 %v1195, 7
        %v1197 = vsub.s32 %v1194, %v1196
        %v1198 = vrot.slane %v1182, %v1197
        %v1200 = vunpack.c.l.s4 1966171168
        %v1201 = vunpack.c.0.s8 %v1200
        %v1202 = vlaneseq
        %v1203 = vshrl.u32 %v1202, 7
        %v1204 = vsub.s32 %v1201, %v1203
        %v1205 = vrot.slane %v1189, %v1204
        %v1207 = vunpack.c.l.s4 1966171168
        %v1208 = vunpack.c.0.s8 %v1207
        %v1209 = vlaneseq
        %v1210 = vshrl.u32 %v1209, 7
        %v1211 = vsub.s32 %v1208, %v1210
        %v1212 = vrot.slane %v1190, %v1211
        %v1214 = vunpack.c.l.s4 1966171168
        %v1215 = vunpack.c.0.s8 %v1214
        %v1216 = vlaneseq
        %v1217 = vshrl.u32 %v1216, 7
        %v1218 = vsub.s32 %v1215, %v1217
        %v1219 = vrot.slane %v1191, %v1218
        %v1220 = vcombine.high %v1198, %v1198
        %v1221 = vcombine.high %v1205, %v1205
        %v1222 = vcombine.high %v1212, %v1212
        %v1223 = vcombine.high %v1219, %v1219
        %v1224 = vlaneseq
        %v1225 = vshrl.u32 %v1224, 7
        %v1226 = vsub.s32 0, %v1225
        %v1227 = vrot.slane %v1198, %v1226
        %v1228 = vlaneseq
        %v1229 = vshrl.u32 %v1228, 7
        %v1230 = vsub.s32 1, %v1229
        %v1231 = vrot.slane %v1198, %v1230
        %v1232 = vlaneseq
        %v1233 = vshrl.u32 %v1232, 7
        %v1234 = vsub.s32 0, %v1233
        %v1235 = vrot.slane %v1212, %v1234
        %v1236 = vlaneseq
        %v1237 = vshrl.u32 %v1236, 7
        %v1238 = vsub.s32 1, %v1237
        %v1239 = vrot.slane %v1212, %v1238
        %v1240 = vlaneseq
        %v1241 = vshrl.u32 %v1240, 7
        %v1242 = vsub.s32 0, %v1241
        %v1243 = vrot.slane %v1220, %v1242
        %v1244 = vlaneseq
        %v1245 = vshrl.u32 %v1244, 7
        %v1246 = vsub.s32 1, %v1245
        %v1247 = vrot.slane %v1220, %v1246
        %v1248 = vlaneseq
        %v1249 = vshrl.u32 %v1248, 7
        %v1250 = vsub.s32 0, %v1249
        %v1251 = vrot.slane %v1222, %v1250
        %v1252 = vlaneseq
        %v1253 = vshrl.u32 %v1252, 7
        %v1254 = vsub.s32 1, %v1253
        %v1255 = vrot.slane %v1222, %v1254
        %v1256 = vlaneseq
        %v1257 = vshrl.u32 %v1256, 7
        %v1258 = vsub.s32 0, %v1257
        %v1259 = vrot.slane %v1205, %v1258
        %v1260 = vlaneseq
        %v1261 = vshrl.u32 %v1260, 7
        %v1262 = vsub.s32 1, %v1261
        %v1263 = vrot.slane %v1205, %v1262
        %v1264 = vlaneseq
        %v1265 = vshrl.u32 %v1264, 7
        %v1266 = vsub.s32 0, %v1265
        %v1267 = vrot.slane %v1219, %v1266
        %v1268 = vlaneseq
        %v1269 = vshrl.u32 %v1268, 7
        %v1270 = vsub.s32 1, %v1269
        %v1271 = vrot.slane %v1219, %v1270
        %v1272 = vlaneseq
        %v1273 = vshrl.u32 %v1272, 7
        %v1274 = vsub.s32 0, %v1273
        %v1275 = vrot.slane %v1221, %v1274
        %v1276 = vlaneseq
        %v1277 = vshrl.u32 %v1276, 7
        %v1278 = vsub.s32 1, %v1277
        %v1279 = vrot.slane %v1221, %v1278
        %v1280 = vlaneseq
        %v1281 = vshrl.u32 %v1280, 7
        %v1282 = vsub.s32 0, %v1281
        %v1283 = vrot.slane %v1223, %v1282
        %v1284 = vlaneseq
        %v1285 = vshrl.u32 %v1284, 7
        %v1286 = vsub.s32 1, %v1285
        %v1287 = vrot.slane %v1223, %v1286
        %1288 = vrot.lane.b32.xlu0 %v1227, 8
        %v1289 = vpop.permute.xlu0 %1288
        %1290 = vrot.lane.b32.xlu0 %v1231, 8
        %v1291 = vpop.permute.xlu0 %1290
        %1292 = vrot.lane.b32.xlu0 %v1235, 8
        %v1293 = vpop.permute.xlu0 %1292
        %1294 = vrot.lane.b32.xlu0 %v1239, 8
        %v1295 = vpop.permute.xlu0 %1294
        %1296 = vrot.lane.b32.xlu0 %v1243, 8
        %v1297 = vpop.permute.xlu0 %1296
        %1298 = vrot.lane.b32.xlu0 %v1247, 8
        %v1299 = vpop.permute.xlu0 %1298
        %1300 = vrot.lane.b32.xlu0 %v1251, 8
        %v1301 = vpop.permute.xlu0 %1300
        %1302 = vrot.lane.b32.xlu0 %v1255, 8
        %v1303 = vpop.permute.xlu0 %1302
        %1304 = vrot.lane.b32.xlu0 %v1259, 8
        %v1305 = vpop.permute.xlu0 %1304
        %1306 = vrot.lane.b32.xlu0 %v1263, 8
        %v1307 = vpop.permute.xlu0 %1306
        %1308 = vrot.lane.b32.xlu0 %v1267, 8
        %v1309 = vpop.permute.xlu0 %1308
        %1310 = vrot.lane.b32.xlu0 %v1271, 8
        %v1311 = vpop.permute.xlu0 %1310
        %1312 = vrot.lane.b32.xlu0 %v1275, 8
        %v1313 = vpop.permute.xlu0 %1312
        %1314 = vrot.lane.b32.xlu0 %v1279, 8
        %v1315 = vpop.permute.xlu0 %1314
        %1316 = vrot.lane.b32.xlu0 %v1283, 8
        %v1317 = vpop.permute.xlu0 %1316
        %1318 = vrot.lane.b32.xlu0 %v1287, 8
        %v1319 = vpop.permute.xlu0 %1318
        %vm1320 = vcmask 64512
        %v1321 = vsel %vm1320, %v1289, %v1291
        %v1322 = vsel %vm1320, %v1293, %v1295
        %v1323 = vsel %vm1320, %v1297, %v1299
        %v1324 = vsel %vm1320, %v1301, %v1303
        %v1325 = vsel %vm1320, %v1305, %v1307
        %v1326 = vsel %vm1320, %v1309, %v1311
        %v1327 = vsel %vm1320, %v1313, %v1315
        %v1328 = vsel %vm1320, %v1317, %v1319
        %1337 = vst.msk [vmem:[%s270 + $0x6] sm:$0x1] %vm972, %v1321
        %1338 = vst.msk [vmem:[%s270 + $0x1e] sm:$0x1] %vm972, %v1322
        %1339 = vst.msk [vmem:[%s270 + $0x36] sm:$0x1] %vm972, %v1323
        %1340 = vst.msk [vmem:[%s270 + $0x4e] sm:$0x1] %vm972, %v1324
        %1341 = vst.msk [vmem:[%s270 + $0x66] sm:$0x1] %vm972, %v1325
        %1342 = vst.msk [vmem:[%s270 + $0x7e] sm:$0x1] %vm972, %v1326
        %1343 = vst.msk [vmem:[%s270 + $0x96] sm:$0x1] %vm972, %v1327
        %1344 = vst.msk [vmem:[%s270 + $0xae] sm:$0x1] %vm972, %v1328
        %v1345 = vcombine.high %v912, %v912
        %v1347 = vunpack.c.l.s4 1966171168
        %v1348 = vunpack.c.0.s8 %v1347
        %v1349 = vlaneseq
        %v1350 = vshrl.u32 %v1349, 7
        %v1351 = vsub.s32 %v1348, %v1350
        %v1352 = vrot.slane %v912, %v1351
        %v1354 = vunpack.c.l.s4 1966171168
        %v1355 = vunpack.c.0.s8 %v1354
        %v1356 = vlaneseq
        %v1357 = vshrl.u32 %v1356, 7
        %v1358 = vsub.s32 %v1355, %v1357
        %v1359 = vrot.slane %v1345, %v1358
        %v1360 = vcombine.high %v1352, %v1352
        %v1361 = vcombine.high %v1359, %v1359
        %v1363 = vunpack.c.l.s4 1966171168
        %v1364 = vunpack.c.0.s8 %v1363
        %v1365 = vlaneseq
        %v1366 = vshrl.u32 %v1365, 7
        %v1367 = vsub.s32 %v1364, %v1366
        %v1368 = vrot.slane %v1352, %v1367
        %v1370 = vunpack.c.l.s4 1966171168
        %v1371 = vunpack.c.0.s8 %v1370
        %v1372 = vlaneseq
        %v1373 = vshrl.u32 %v1372, 7
        %v1374 = vsub.s32 %v1371, %v1373
        %v1375 = vrot.slane %v1359, %v1374
        %v1377 = vunpack.c.l.s4 1966171168
        %v1378 = vunpack.c.0.s8 %v1377
        %v1379 = vlaneseq
        %v1380 = vshrl.u32 %v1379, 7
        %v1381 = vsub.s32 %v1378, %v1380
        %v1382 = vrot.slane %v1360, %v1381
        %v1384 = vunpack.c.l.s4 1966171168
        %v1385 = vunpack.c.0.s8 %v1384
        %v1386 = vlaneseq
        %v1387 = vshrl.u32 %v1386, 7
        %v1388 = vsub.s32 %v1385, %v1387
        %v1389 = vrot.slane %v1361, %v1388
        %v1390 = vcombine.high %v1368, %v1368
        %v1391 = vcombine.high %v1375, %v1375
        %v1392 = vcombine.high %v1382, %v1382
        %v1393 = vcombine.high %v1389, %v1389
        %v1394 = vlaneseq
        %v1395 = vshrl.u32 %v1394, 7
        %v1396 = vsub.s32 0, %v1395
        %v1397 = vrot.slane %v1368, %v1396
        %v1398 = vlaneseq
        %v1399 = vshrl.u32 %v1398, 7
        %v1400 = vsub.s32 0, %v1399
        %v1401 = vrot.slane %v1382, %v1400
        %v1402 = vlaneseq
        %v1403 = vshrl.u32 %v1402, 7
        %v1404 = vsub.s32 0, %v1403
        %v1405 = vrot.slane %v1390, %v1404
        %v1406 = vlaneseq
        %v1407 = vshrl.u32 %v1406, 7
        %v1408 = vsub.s32 0, %v1407
        %v1409 = vrot.slane %v1392, %v1408
        %v1410 = vlaneseq
        %v1411 = vshrl.u32 %v1410, 7
        %v1412 = vsub.s32 0, %v1411
        %v1413 = vrot.slane %v1375, %v1412
        %v1414 = vlaneseq
        %v1415 = vshrl.u32 %v1414, 7
        %v1416 = vsub.s32 0, %v1415
        %v1417 = vrot.slane %v1389, %v1416
        %v1418 = vlaneseq
        %v1419 = vshrl.u32 %v1418, 7
        %v1420 = vsub.s32 0, %v1419
        %v1421 = vrot.slane %v1391, %v1420
        %v1422 = vlaneseq
        %v1423 = vshrl.u32 %v1422, 7
        %v1424 = vsub.s32 0, %v1423
        %v1425 = vrot.slane %v1393, %v1424
        %1426 = vrot.lane.b32.xlu0 %v1397, 116
        %v1427 = vpop.permute.xlu0 %1426
        %1428 = vrot.lane.b32.xlu0 %v1401, 116
        %v1429 = vpop.permute.xlu0 %1428
        %1430 = vrot.lane.b32.xlu0 %v1405, 116
        %v1431 = vpop.permute.xlu0 %1430
        %1432 = vrot.lane.b32.xlu0 %v1409, 116
        %v1433 = vpop.permute.xlu0 %1432
        %1434 = vrot.lane.b32.xlu0 %v1413, 116
        %v1435 = vpop.permute.xlu0 %1434
        %1436 = vrot.lane.b32.xlu0 %v1417, 116
        %v1437 = vpop.permute.xlu0 %1436
        %1438 = vrot.lane.b32.xlu0 %v1421, 116
        %v1439 = vpop.permute.xlu0 %1438
        %1440 = vrot.lane.b32.xlu0 %v1425, 116
        %v1441 = vpop.permute.xlu0 %1440
        %1450 = vst.msk [vmem:[%s270 + $0x7] sm:$0x1] %vm972, %v1427
        %1451 = vst.msk [vmem:[%s270 + $0x1f] sm:$0x1] %vm972, %v1429
        %1452 = vst.msk [vmem:[%s270 + $0x37] sm:$0x1] %vm972, %v1431
        %1453 = vst.msk [vmem:[%s270 + $0x4f] sm:$0x1] %vm972, %v1433
        %1454 = vst.msk [vmem:[%s270 + $0x67] sm:$0x1] %vm972, %v1435
        %1455 = vst.msk [vmem:[%s270 + $0x7f] sm:$0x1] %vm972, %v1437
        %1456 = vst.msk [vmem:[%s270 + $0x97] sm:$0x1] %vm972, %v1439
        %1457 = vst.msk [vmem:[%s270 + $0xaf] sm:$0x1] %vm972, %v1441
        %1458 = vrot.lane.b32.xlu0 %v1397, 96
        %v1459 = vpop.permute.xlu0 %1458
        %1460 = vrot.lane.b32.xlu0 %v1401, 96
        %v1461 = vpop.permute.xlu0 %1460
        %1462 = vrot.lane.b32.xlu0 %v1405, 96
        %v1463 = vpop.permute.xlu0 %1462
        %1464 = vrot.lane.b32.xlu0 %v1409, 96
        %v1465 = vpop.permute.xlu0 %1464
        %1466 = vrot.lane.b32.xlu0 %v1413, 96
        %v1467 = vpop.permute.xlu0 %1466
        %1468 = vrot.lane.b32.xlu0 %v1417, 96
        %v1469 = vpop.permute.xlu0 %1468
        %1470 = vrot.lane.b32.xlu0 %v1421, 96
        %v1471 = vpop.permute.xlu0 %1470
        %1472 = vrot.lane.b32.xlu0 %v1425, 96
        %v1473 = vpop.permute.xlu0 %1472
        %1482 = vst.msk [vmem:[%s270 + $0x8] sm:$0x1] %vm972, %v1459
        %1483 = vst.msk [vmem:[%s270 + $0x20] sm:$0x1] %vm972, %v1461
        %1484 = vst.msk [vmem:[%s270 + $0x38] sm:$0x1] %vm972, %v1463
        %1485 = vst.msk [vmem:[%s270 + $0x50] sm:$0x1] %vm972, %v1465
        %1486 = vst.msk [vmem:[%s270 + $0x68] sm:$0x1] %vm972, %v1467
        %1487 = vst.msk [vmem:[%s270 + $0x80] sm:$0x1] %vm972, %v1469
        %1488 = vst.msk [vmem:[%s270 + $0x98] sm:$0x1] %vm972, %v1471
        %1489 = vst.msk [vmem:[%s270 + $0xb0] sm:$0x1] %vm972, %v1473
        %1490 = vrot.lane.b32.xlu0 %v1397, 76
        %v1491 = vpop.permute.xlu0 %1490
        %1492 = vrot.lane.b32.xlu0 %v1401, 76
        %v1493 = vpop.permute.xlu0 %1492
        %1494 = vrot.lane.b32.xlu0 %v1405, 76
        %v1495 = vpop.permute.xlu0 %1494
        %1496 = vrot.lane.b32.xlu0 %v1409, 76
        %v1497 = vpop.permute.xlu0 %1496
        %1498 = vrot.lane.b32.xlu0 %v1413, 76
        %v1499 = vpop.permute.xlu0 %1498
        %1500 = vrot.lane.b32.xlu0 %v1417, 76
        %v1501 = vpop.permute.xlu0 %1500
        %1502 = vrot.lane.b32.xlu0 %v1421, 76
        %v1503 = vpop.permute.xlu0 %1502
        %1504 = vrot.lane.b32.xlu0 %v1425, 76
        %v1505 = vpop.permute.xlu0 %1504
        %1514 = vst.msk [vmem:[%s270 + $0x9] sm:$0x1] %vm972, %v1491
        %1515 = vst.msk [vmem:[%s270 + $0x21] sm:$0x1] %vm972, %v1493
        %1516 = vst.msk [vmem:[%s270 + $0x39] sm:$0x1] %vm972, %v1495
        %1517 = vst.msk [vmem:[%s270 + $0x51] sm:$0x1] %vm972, %v1497
        %1518 = vst.msk [vmem:[%s270 + $0x69] sm:$0x1] %vm972, %v1499
        %1519 = vst.msk [vmem:[%s270 + $0x81] sm:$0x1] %vm972, %v1501
        %1520 = vst.msk [vmem:[%s270 + $0x99] sm:$0x1] %vm972, %v1503
        %1521 = vst.msk [vmem:[%s270 + $0xb1] sm:$0x1] %vm972, %v1505
        %1522 = vrot.lane.b32.xlu0 %v1397, 56
        %v1523 = vpop.permute.xlu0 %1522
        %1524 = vrot.lane.b32.xlu0 %v1401, 56
        %v1525 = vpop.permute.xlu0 %1524
        %1526 = vrot.lane.b32.xlu0 %v1405, 56
        %v1527 = vpop.permute.xlu0 %1526
        %1528 = vrot.lane.b32.xlu0 %v1409, 56
        %v1529 = vpop.permute.xlu0 %1528
        %1530 = vrot.lane.b32.xlu0 %v1413, 56
        %v1531 = vpop.permute.xlu0 %1530
        %1532 = vrot.lane.b32.xlu0 %v1417, 56
        %v1533 = vpop.permute.xlu0 %1532
        %1534 = vrot.lane.b32.xlu0 %v1421, 56
        %v1535 = vpop.permute.xlu0 %1534
        %1536 = vrot.lane.b32.xlu0 %v1425, 56
        %v1537 = vpop.permute.xlu0 %1536
        %1546 = vst.msk [vmem:[%s270 + $0xa] sm:$0x1] %vm972, %v1523
        %1547 = vst.msk [vmem:[%s270 + $0x22] sm:$0x1] %vm972, %v1525
        %1548 = vst.msk [vmem:[%s270 + $0x3a] sm:$0x1] %vm972, %v1527
        %1549 = vst.msk [vmem:[%s270 + $0x52] sm:$0x1] %vm972, %v1529
        %1550 = vst.msk [vmem:[%s270 + $0x6a] sm:$0x1] %vm972, %v1531
        %1551 = vst.msk [vmem:[%s270 + $0x82] sm:$0x1] %vm972, %v1533
        %1552 = vst.msk [vmem:[%s270 + $0x9a] sm:$0x1] %vm972, %v1535
        %1553 = vst.msk [vmem:[%s270 + $0xb2] sm:$0x1] %vm972, %v1537
        %1554 = vrot.lane.b32.xlu0 %v1397, 36
        %v1555 = vpop.permute.xlu0 %1554
        %1556 = vrot.lane.b32.xlu0 %v1401, 36
        %v1557 = vpop.permute.xlu0 %1556
        %1558 = vrot.lane.b32.xlu0 %v1405, 36
        %v1559 = vpop.permute.xlu0 %1558
        %1560 = vrot.lane.b32.xlu0 %v1409, 36
        %v1561 = vpop.permute.xlu0 %1560
        %1562 = vrot.lane.b32.xlu0 %v1413, 36
        %v1563 = vpop.permute.xlu0 %1562
        %1564 = vrot.lane.b32.xlu0 %v1417, 36
        %v1565 = vpop.permute.xlu0 %1564
        %1566 = vrot.lane.b32.xlu0 %v1421, 36
        %v1567 = vpop.permute.xlu0 %1566
        %1568 = vrot.lane.b32.xlu0 %v1425, 36
        %v1569 = vpop.permute.xlu0 %1568
        %1578 = vst.msk [vmem:[%s270 + $0xb] sm:$0x1] %vm972, %v1555
        %1579 = vst.msk [vmem:[%s270 + $0x23] sm:$0x1] %vm972, %v1557
        %1580 = vst.msk [vmem:[%s270 + $0x3b] sm:$0x1] %vm972, %v1559
        %1581 = vst.msk [vmem:[%s270 + $0x53] sm:$0x1] %vm972, %v1561
        %1582 = vst.msk [vmem:[%s270 + $0x6b] sm:$0x1] %vm972, %v1563
        %1583 = vst.msk [vmem:[%s270 + $0x83] sm:$0x1] %vm972, %v1565
        %1584 = vst.msk [vmem:[%s270 + $0x9b] sm:$0x1] %vm972, %v1567
        %1585 = vst.msk [vmem:[%s270 + $0xb3] sm:$0x1] %vm972, %v1569
        %v1587 = vcombine.low %v912, %v913
        %v1588 = vcombine.high %v912, %v913
        %v1590 = vunpack.c.l.s4 1966171168
        %v1591 = vunpack.c.0.s8 %v1590
        %v1592 = vlaneseq
        %v1593 = vshrl.u32 %v1592, 7
        %v1594 = vsub.s32 %v1591, %v1593
        %v1595 = vrot.slane %v1587, %v1594
        %v1597 = vunpack.c.l.s4 1966171168
        %v1598 = vunpack.c.0.s8 %v1597
        %v1599 = vlaneseq
        %v1600 = vshrl.u32 %v1599, 7
        %v1601 = vsub.s32 %v1598, %v1600
        %v1602 = vrot.slane %v1588, %v1601
        %v1603 = vcombine.high %v1595, %v1595
        %v1604 = vcombine.high %v1602, %v1602
        %v1606 = vunpack.c.l.s4 1966171168
        %v1607 = vunpack.c.0.s8 %v1606
        %v1608 = vlaneseq
        %v1609 = vshrl.u32 %v1608, 7
        %v1610 = vsub.s32 %v1607, %v1609
        %v1611 = vrot.slane %v1595, %v1610
        %v1613 = vunpack.c.l.s4 1966171168
        %v1614 = vunpack.c.0.s8 %v1613
        %v1615 = vlaneseq
        %v1616 = vshrl.u32 %v1615, 7
        %v1617 = vsub.s32 %v1614, %v1616
        %v1618 = vrot.slane %v1602, %v1617
        %v1620 = vunpack.c.l.s4 1966171168
        %v1621 = vunpack.c.0.s8 %v1620
        %v1622 = vlaneseq
        %v1623 = vshrl.u32 %v1622, 7
        %v1624 = vsub.s32 %v1621, %v1623
        %v1625 = vrot.slane %v1603, %v1624
        %v1627 = vunpack.c.l.s4 1966171168
        %v1628 = vunpack.c.0.s8 %v1627
        %v1629 = vlaneseq
        %v1630 = vshrl.u32 %v1629, 7
        %v1631 = vsub.s32 %v1628, %v1630
        %v1632 = vrot.slane %v1604, %v1631
        %v1633 = vcombine.high %v1611, %v1611
        %v1634 = vcombine.high %v1618, %v1618
        %v1635 = vcombine.high %v1625, %v1625
        %v1636 = vcombine.high %v1632, %v1632
        %v1637 = vlaneseq
        %v1638 = vshrl.u32 %v1637, 7
        %v1639 = vsub.s32 0, %v1638
        %v1640 = vrot.slane %v1611, %v1639
        %v1641 = vlaneseq
        %v1642 = vshrl.u32 %v1641, 7
        %v1643 = vsub.s32 1, %v1642
        %v1644 = vrot.slane %v1611, %v1643
        %v1645 = vlaneseq
        %v1646 = vshrl.u32 %v1645, 7
        %v1647 = vsub.s32 0, %v1646
        %v1648 = vrot.slane %v1625, %v1647
        %v1649 = vlaneseq
        %v1650 = vshrl.u32 %v1649, 7
        %v1651 = vsub.s32 1, %v1650
        %v1652 = vrot.slane %v1625, %v1651
        %v1653 = vlaneseq
        %v1654 = vshrl.u32 %v1653, 7
        %v1655 = vsub.s32 0, %v1654
        %v1656 = vrot.slane %v1633, %v1655
        %v1657 = vlaneseq
        %v1658 = vshrl.u32 %v1657, 7
        %v1659 = vsub.s32 1, %v1658
        %v1660 = vrot.slane %v1633, %v1659
        %v1661 = vlaneseq
        %v1662 = vshrl.u32 %v1661, 7
        %v1663 = vsub.s32 0, %v1662
        %v1664 = vrot.slane %v1635, %v1663
        %v1665 = vlaneseq
        %v1666 = vshrl.u32 %v1665, 7
        %v1667 = vsub.s32 1, %v1666
        %v1668 = vrot.slane %v1635, %v1667
        %v1669 = vlaneseq
        %v1670 = vshrl.u32 %v1669, 7
        %v1671 = vsub.s32 0, %v1670
        %v1672 = vrot.slane %v1618, %v1671
        %v1673 = vlaneseq
        %v1674 = vshrl.u32 %v1673, 7
        %v1675 = vsub.s32 1, %v1674
        %v1676 = vrot.slane %v1618, %v1675
        %v1677 = vlaneseq
        %v1678 = vshrl.u32 %v1677, 7
        %v1679 = vsub.s32 0, %v1678
        %v1680 = vrot.slane %v1632, %v1679
        %v1681 = vlaneseq
        %v1682 = vshrl.u32 %v1681, 7
        %v1683 = vsub.s32 1, %v1682
        %v1684 = vrot.slane %v1632, %v1683
        %v1685 = vlaneseq
        %v1686 = vshrl.u32 %v1685, 7
        %v1687 = vsub.s32 0, %v1686
        %v1688 = vrot.slane %v1634, %v1687
        %v1689 = vlaneseq
        %v1690 = vshrl.u32 %v1689, 7
        %v1691 = vsub.s32 1, %v1690
        %v1692 = vrot.slane %v1634, %v1691
        %v1693 = vlaneseq
        %v1694 = vshrl.u32 %v1693, 7
        %v1695 = vsub.s32 0, %v1694
        %v1696 = vrot.slane %v1636, %v1695
        %v1697 = vlaneseq
        %v1698 = vshrl.u32 %v1697, 7
        %v1699 = vsub.s32 1, %v1698
        %v1700 = vrot.slane %v1636, %v1699
        %1701 = vrot.lane.b32.xlu0 %v1640, 16
        %v1702 = vpop.permute.xlu0 %1701
        %1703 = vrot.lane.b32.xlu0 %v1644, 16
        %v1704 = vpop.permute.xlu0 %1703
        %1705 = vrot.lane.b32.xlu0 %v1648, 16
        %v1706 = vpop.permute.xlu0 %1705
        %1707 = vrot.lane.b32.xlu0 %v1652, 16
        %v1708 = vpop.permute.xlu0 %1707
        %1709 = vrot.lane.b32.xlu0 %v1656, 16
        %v1710 = vpop.permute.xlu0 %1709
        %1711 = vrot.lane.b32.xlu0 %v1660, 16
        %v1712 = vpop.permute.xlu0 %1711
        %1713 = vrot.lane.b32.xlu0 %v1664, 16
        %v1714 = vpop.permute.xlu0 %1713
        %1715 = vrot.lane.b32.xlu0 %v1668, 16
        %v1716 = vpop.permute.xlu0 %1715
        %1717 = vrot.lane.b32.xlu0 %v1672, 16
        %v1718 = vpop.permute.xlu0 %1717
        %1719 = vrot.lane.b32.xlu0 %v1676, 16
        %v1720 = vpop.permute.xlu0 %1719
        %1721 = vrot.lane.b32.xlu0 %v1680, 16
        %v1722 = vpop.permute.xlu0 %1721
        %1723 = vrot.lane.b32.xlu0 %v1684, 16
        %v1724 = vpop.permute.xlu0 %1723
        %1725 = vrot.lane.b32.xlu0 %v1688, 16
        %v1726 = vpop.permute.xlu0 %1725
        %1727 = vrot.lane.b32.xlu0 %v1692, 16
        %v1728 = vpop.permute.xlu0 %1727
        %1729 = vrot.lane.b32.xlu0 %v1696, 16
        %v1730 = vpop.permute.xlu0 %1729
        %1731 = vrot.lane.b32.xlu0 %v1700, 16
        %v1732 = vpop.permute.xlu0 %1731
        %vm1733 = vcmask 130048
        %v1734 = vsel %vm1733, %v1702, %v1704
        %v1735 = vsel %vm1733, %v1706, %v1708
        %v1736 = vsel %vm1733, %v1710, %v1712
        %v1737 = vsel %vm1733, %v1714, %v1716
        %v1738 = vsel %vm1733, %v1718, %v1720
        %v1739 = vsel %vm1733, %v1722, %v1724
        %v1740 = vsel %vm1733, %v1726, %v1728
        %v1741 = vsel %vm1733, %v1730, %v1732
        %1750 = vst.msk [vmem:[%s270 + $0xc] sm:$0x1] %vm972, %v1734
        %1751 = vst.msk [vmem:[%s270 + $0x24] sm:$0x1] %vm972, %v1735
        %1752 = vst.msk [vmem:[%s270 + $0x3c] sm:$0x1] %vm972, %v1736
        %1753 = vst.msk [vmem:[%s270 + $0x54] sm:$0x1] %vm972, %v1737
        %1754 = vst.msk [vmem:[%s270 + $0x6c] sm:$0x1] %vm972, %v1738
        %1755 = vst.msk [vmem:[%s270 + $0x84] sm:$0x1] %vm972, %v1739
        %1756 = vst.msk [vmem:[%s270 + $0x9c] sm:$0x1] %vm972, %v1740
        %1757 = vst.msk [vmem:[%s270 + $0xb4] sm:$0x1] %vm972, %v1741
        %v1758 = vcombine.high %v913, %v913
        %v1760 = vunpack.c.l.s4 1966171168
        %v1761 = vunpack.c.0.s8 %v1760
        %v1762 = vlaneseq
        %v1763 = vshrl.u32 %v1762, 7
        %v1764 = vsub.s32 %v1761, %v1763
        %v1765 = vrot.slane %v913, %v1764
        %v1767 = vunpack.c.l.s4 1966171168
        %v1768 = vunpack.c.0.s8 %v1767
        %v1769 = vlaneseq
        %v1770 = vshrl.u32 %v1769, 7
        %v1771 = vsub.s32 %v1768, %v1770
        %v1772 = vrot.slane %v1758, %v1771
        %v1773 = vcombine.high %v1765, %v1765
        %v1774 = vcombine.high %v1772, %v1772
        %v1776 = vunpack.c.l.s4 1966171168
        %v1777 = vunpack.c.0.s8 %v1776
        %v1778 = vlaneseq
        %v1779 = vshrl.u32 %v1778, 7
        %v1780 = vsub.s32 %v1777, %v1779
        %v1781 = vrot.slane %v1765, %v1780
        %v1783 = vunpack.c.l.s4 1966171168
        %v1784 = vunpack.c.0.s8 %v1783
        %v1785 = vlaneseq
        %v1786 = vshrl.u32 %v1785, 7
        %v1787 = vsub.s32 %v1784, %v1786
        %v1788 = vrot.slane %v1772, %v1787
        %v1790 = vunpack.c.l.s4 1966171168
        %v1791 = vunpack.c.0.s8 %v1790
        %v1792 = vlaneseq
        %v1793 = vshrl.u32 %v1792, 7
        %v1794 = vsub.s32 %v1791, %v1793
        %v1795 = vrot.slane %v1773, %v1794
        %v1797 = vunpack.c.l.s4 1966171168
        %v1798 = vunpack.c.0.s8 %v1797
        %v1799 = vlaneseq
        %v1800 = vshrl.u32 %v1799, 7
        %v1801 = vsub.s32 %v1798, %v1800
        %v1802 = vrot.slane %v1774, %v1801
        %v1803 = vcombine.high %v1781, %v1781
        %v1804 = vcombine.high %v1788, %v1788
        %v1805 = vcombine.high %v1795, %v1795
        %v1806 = vcombine.high %v1802, %v1802
        %v1807 = vlaneseq
        %v1808 = vshrl.u32 %v1807, 7
        %v1809 = vsub.s32 0, %v1808
        %v1810 = vrot.slane %v1781, %v1809
        %v1811 = vlaneseq
        %v1812 = vshrl.u32 %v1811, 7
        %v1813 = vsub.s32 0, %v1812
        %v1814 = vrot.slane %v1795, %v1813
        %v1815 = vlaneseq
        %v1816 = vshrl.u32 %v1815, 7
        %v1817 = vsub.s32 0, %v1816
        %v1818 = vrot.slane %v1803, %v1817
        %v1819 = vlaneseq
        %v1820 = vshrl.u32 %v1819, 7
        %v1821 = vsub.s32 0, %v1820
        %v1822 = vrot.slane %v1805, %v1821
        %v1823 = vlaneseq
        %v1824 = vshrl.u32 %v1823, 7
        %v1825 = vsub.s32 0, %v1824
        %v1826 = vrot.slane %v1788, %v1825
        %v1827 = vlaneseq
        %v1828 = vshrl.u32 %v1827, 7
        %v1829 = vsub.s32 0, %v1828
        %v1830 = vrot.slane %v1802, %v1829
        %v1831 = vlaneseq
        %v1832 = vshrl.u32 %v1831, 7
        %v1833 = vsub.s32 0, %v1832
        %v1834 = vrot.slane %v1804, %v1833
        %v1835 = vlaneseq
        %v1836 = vshrl.u32 %v1835, 7
        %v1837 = vsub.s32 0, %v1836
        %v1838 = vrot.slane %v1806, %v1837
        %1839 = vrot.lane.b32.xlu0 %v1810, 124
        %v1840 = vpop.permute.xlu0 %1839
        %1841 = vrot.lane.b32.xlu0 %v1814, 124
        %v1842 = vpop.permute.xlu0 %1841
        %1843 = vrot.lane.b32.xlu0 %v1818, 124
        %v1844 = vpop.permute.xlu0 %1843
        %1845 = vrot.lane.b32.xlu0 %v1822, 124
        %v1846 = vpop.permute.xlu0 %1845
        %1847 = vrot.lane.b32.xlu0 %v1826, 124
        %v1848 = vpop.permute.xlu0 %1847
        %1849 = vrot.lane.b32.xlu0 %v1830, 124
        %v1850 = vpop.permute.xlu0 %1849
        %1851 = vrot.lane.b32.xlu0 %v1834, 124
        %v1852 = vpop.permute.xlu0 %1851
        %1853 = vrot.lane.b32.xlu0 %v1838, 124
        %v1854 = vpop.permute.xlu0 %1853
        %1863 = vst.msk [vmem:[%s270 + $0xd] sm:$0x1] %vm972, %v1840
        %1864 = vst.msk [vmem:[%s270 + $0x25] sm:$0x1] %vm972, %v1842
        %1865 = vst.msk [vmem:[%s270 + $0x3d] sm:$0x1] %vm972, %v1844
        %1866 = vst.msk [vmem:[%s270 + $0x55] sm:$0x1] %vm972, %v1846
        %1867 = vst.msk [vmem:[%s270 + $0x6d] sm:$0x1] %vm972, %v1848
        %1868 = vst.msk [vmem:[%s270 + $0x85] sm:$0x1] %vm972, %v1850
        %1869 = vst.msk [vmem:[%s270 + $0x9d] sm:$0x1] %vm972, %v1852
        %1870 = vst.msk [vmem:[%s270 + $0xb5] sm:$0x1] %vm972, %v1854
        %1871 = vrot.lane.b32.xlu0 %v1810, 104
        %v1872 = vpop.permute.xlu0 %1871
        %1873 = vrot.lane.b32.xlu0 %v1814, 104
        %v1874 = vpop.permute.xlu0 %1873
        %1875 = vrot.lane.b32.xlu0 %v1818, 104
        %v1876 = vpop.permute.xlu0 %1875
        %1877 = vrot.lane.b32.xlu0 %v1822, 104
        %v1878 = vpop.permute.xlu0 %1877
        %1879 = vrot.lane.b32.xlu0 %v1826, 104
        %v1880 = vpop.permute.xlu0 %1879
        %1881 = vrot.lane.b32.xlu0 %v1830, 104
        %v1882 = vpop.permute.xlu0 %1881
        %1883 = vrot.lane.b32.xlu0 %v1834, 104
        %v1884 = vpop.permute.xlu0 %1883
        %1885 = vrot.lane.b32.xlu0 %v1838, 104
        %v1886 = vpop.permute.xlu0 %1885
        %1895 = vst.msk [vmem:[%s270 + $0xe] sm:$0x1] %vm972, %v1872
        %1896 = vst.msk [vmem:[%s270 + $0x26] sm:$0x1] %vm972, %v1874
        %1897 = vst.msk [vmem:[%s270 + $0x3e] sm:$0x1] %vm972, %v1876
        %1898 = vst.msk [vmem:[%s270 + $0x56] sm:$0x1] %vm972, %v1878
        %1899 = vst.msk [vmem:[%s270 + $0x6e] sm:$0x1] %vm972, %v1880
        %1900 = vst.msk [vmem:[%s270 + $0x86] sm:$0x1] %vm972, %v1882
        %1901 = vst.msk [vmem:[%s270 + $0x9e] sm:$0x1] %vm972, %v1884
        %1902 = vst.msk [vmem:[%s270 + $0xb6] sm:$0x1] %vm972, %v1886
        %1903 = vrot.lane.b32.xlu0 %v1810, 84
        %v1904 = vpop.permute.xlu0 %1903
        %1905 = vrot.lane.b32.xlu0 %v1814, 84
        %v1906 = vpop.permute.xlu0 %1905
        %1907 = vrot.lane.b32.xlu0 %v1818, 84
        %v1908 = vpop.permute.xlu0 %1907
        %1909 = vrot.lane.b32.xlu0 %v1822, 84
        %v1910 = vpop.permute.xlu0 %1909
        %1911 = vrot.lane.b32.xlu0 %v1826, 84
        %v1912 = vpop.permute.xlu0 %1911
        %1913 = vrot.lane.b32.xlu0 %v1830, 84
        %v1914 = vpop.permute.xlu0 %1913
        %1915 = vrot.lane.b32.xlu0 %v1834, 84
        %v1916 = vpop.permute.xlu0 %1915
        %1917 = vrot.lane.b32.xlu0 %v1838, 84
        %v1918 = vpop.permute.xlu0 %1917
        %1927 = vst.msk [vmem:[%s270 + $0xf] sm:$0x1] %vm972, %v1904
        %1928 = vst.msk [vmem:[%s270 + $0x27] sm:$0x1] %vm972, %v1906
        %1929 = vst.msk [vmem:[%s270 + $0x3f] sm:$0x1] %vm972, %v1908
        %1930 = vst.msk [vmem:[%s270 + $0x57] sm:$0x1] %vm972, %v1910
        %1931 = vst.msk [vmem:[%s270 + $0x6f] sm:$0x1] %vm972, %v1912
        %1932 = vst.msk [vmem:[%s270 + $0x87] sm:$0x1] %vm972, %v1914
        %1933 = vst.msk [vmem:[%s270 + $0x9f] sm:$0x1] %vm972, %v1916
        %1934 = vst.msk [vmem:[%s270 + $0xb7] sm:$0x1] %vm972, %v1918
        %1935 = vrot.lane.b32.xlu0 %v1810, 64
        %v1936 = vpop.permute.xlu0 %1935
        %1937 = vrot.lane.b32.xlu0 %v1814, 64
        %v1938 = vpop.permute.xlu0 %1937
        %1939 = vrot.lane.b32.xlu0 %v1818, 64
        %v1940 = vpop.permute.xlu0 %1939
        %1941 = vrot.lane.b32.xlu0 %v1822, 64
        %v1942 = vpop.permute.xlu0 %1941
        %1943 = vrot.lane.b32.xlu0 %v1826, 64
        %v1944 = vpop.permute.xlu0 %1943
        %1945 = vrot.lane.b32.xlu0 %v1830, 64
        %v1946 = vpop.permute.xlu0 %1945
        %1947 = vrot.lane.b32.xlu0 %v1834, 64
        %v1948 = vpop.permute.xlu0 %1947
        %1949 = vrot.lane.b32.xlu0 %v1838, 64
        %v1950 = vpop.permute.xlu0 %1949
        %1959 = vst.msk [vmem:[%s270 + $0x10] sm:$0x1] %vm972, %v1936
        %1960 = vst.msk [vmem:[%s270 + $0x28] sm:$0x1] %vm972, %v1938
        %1961 = vst.msk [vmem:[%s270 + $0x40] sm:$0x1] %vm972, %v1940
        %1962 = vst.msk [vmem:[%s270 + $0x58] sm:$0x1] %vm972, %v1942
        %1963 = vst.msk [vmem:[%s270 + $0x70] sm:$0x1] %vm972, %v1944
        %1964 = vst.msk [vmem:[%s270 + $0x88] sm:$0x1] %vm972, %v1946
        %1965 = vst.msk [vmem:[%s270 + $0xa0] sm:$0x1] %vm972, %v1948
        %1966 = vst.msk [vmem:[%s270 + $0xb8] sm:$0x1] %vm972, %v1950
        %1967 = vrot.lane.b32.xlu0 %v1810, 44
        %v1968 = vpop.permute.xlu0 %1967
        %1969 = vrot.lane.b32.xlu0 %v1814, 44
        %v1970 = vpop.permute.xlu0 %1969
        %1971 = vrot.lane.b32.xlu0 %v1818, 44
        %v1972 = vpop.permute.xlu0 %1971
        %1973 = vrot.lane.b32.xlu0 %v1822, 44
        %v1974 = vpop.permute.xlu0 %1973
        %1975 = vrot.lane.b32.xlu0 %v1826, 44
        %v1976 = vpop.permute.xlu0 %1975
        %1977 = vrot.lane.b32.xlu0 %v1830, 44
        %v1978 = vpop.permute.xlu0 %1977
        %1979 = vrot.lane.b32.xlu0 %v1834, 44
        %v1980 = vpop.permute.xlu0 %1979
        %1981 = vrot.lane.b32.xlu0 %v1838, 44
        %v1982 = vpop.permute.xlu0 %1981
        %1991 = vst.msk [vmem:[%s270 + $0x11] sm:$0x1] %vm972, %v1968
        %1992 = vst.msk [vmem:[%s270 + $0x29] sm:$0x1] %vm972, %v1970
        %1993 = vst.msk [vmem:[%s270 + $0x41] sm:$0x1] %vm972, %v1972
        %1994 = vst.msk [vmem:[%s270 + $0x59] sm:$0x1] %vm972, %v1974
        %1995 = vst.msk [vmem:[%s270 + $0x71] sm:$0x1] %vm972, %v1976
        %1996 = vst.msk [vmem:[%s270 + $0x89] sm:$0x1] %vm972, %v1978
        %1997 = vst.msk [vmem:[%s270 + $0xa1] sm:$0x1] %vm972, %v1980
        %1998 = vst.msk [vmem:[%s270 + $0xb9] sm:$0x1] %vm972, %v1982
        %s1999 = sand.u32 %s146, 1
        %s2000 = sand.u32 %s146, 1
        %s2001 = smul.addr %s2000, 192
        %s2002 = scalar_lea.vmem [#allocation3], %s2001
        // Predicated region
        $region37: #{conv_transpose_block_3d.1} parent=35 // pred_check
          %p2003 = pneg %p156
        $region38: #{conv_transpose_block_3d.1} parent=35 // pred_check_branch
          %2005 = sbr.rel (%p2003) target = $region40
        $region39: #{conv_transpose_block_3d.1} parent=35 // pred_region
          %s2006 = smul.addr %s20, 3
          %s2007 = smul.addr %s19, 432
          %s2008 = sadd.s32 %s2006, %s2007
          %s2009 = smul.addr %s2008, 8
          %s2010 = scalar_lea.vmem %s4, %s2009
          // Predicated region
          $region41: #{conv_transpose_block_3d.1} parent=39 // pred_check
            _
          $region42: #{conv_transpose_block_3d.1} parent=39 // pred_check_branch
            %2012 = sbr.rel (0) target = $region44
          $region43: #{conv_transpose_block_3d.1} parent=39 // pred_region
            // Predicated region
            $region45: #{conv_transpose_block_3d.1} parent=43 // pred_check
              _
            $region46: #{conv_transpose_block_3d.1} parent=43 // pred_check_branch
              %2014 = sbr.rel (0) target = $region48
            $region47: #{conv_transpose_block_3d.1} parent=43 // pred_region
              // Predicated region
              $region60: #{conv_transpose_block_3d.1} parent=47 // pred_check
                _
              $region61: #{conv_transpose_block_3d.1} parent=47 // pred_check_branch
                %2076 = sbr.rel (0) target = $region63
              $region62: #{conv_transpose_block_3d.1} parent=47 // pred_region
                loop: start=0, step=1, limit=1
                $region64: #{conv_transpose_block_3d.1} parent=62 // loop_pre_header
                  _
                $region65: #{conv_transpose_block_3d.1} parent=62 // loop_header
                  %s2078 = sphi 0, %s2082
                  %p2079 = scmp.ge.s32.totalorder %s2078, 1
                  %s2083 = sphi %s2002, %s2002
                  %s2084 = sphi %s2010, %s2010
                $region66: #{conv_transpose_block_3d.1} parent=62 // loop_header_branch
                  %2081 = sbr.rel (%p2079) target = $region70
                $region67: #{conv_transpose_block_3d.1} parent=62 // loop_body
                  %v2085 = vld [vmem:[%s2083] sm:$0xff]
                  %2086 = vst [vmem:[%s2084] sm:$0xff] %v2085
                  %v2087 = vld [vmem:[%s2083 + $0x8] sm:$0xff]
                  %2088 = vst [vmem:[%s2084 + $0x8] sm:$0xff] %v2087
                  %v2089 = vld [vmem:[%s2083 + $0x10] sm:$0xff]
                  %2090 = vst [vmem:[%s2084 + $0x10] sm:$0xff] %v2089
                  %v2091 = vld [vmem:[%s2083 + $0x18] sm:$0xff]
                  %2092 = vst [vmem:[%s2084 + $0x1b0] sm:$0xff] %v2091
                  %v2093 = vld [vmem:[%s2083 + $0x20] sm:$0xff]
                  %2094 = vst [vmem:[%s2084 + $0x1b8] sm:$0xff] %v2093
                  %v2095 = vld [vmem:[%s2083 + $0x28] sm:$0xff]
                  %2096 = vst [vmem:[%s2084 + $0x1c0] sm:$0xff] %v2095
                  %v2097 = vld [vmem:[%s2083 + $0x30] sm:$0xff]
                  %2098 = vst [vmem:[%s2084 + $0x360] sm:$0xff] %v2097
                  %v2099 = vld [vmem:[%s2083 + $0x38] sm:$0xff]
                  %2100 = vst [vmem:[%s2084 + $0x368] sm:$0xff] %v2099
                  %v2101 = vld [vmem:[%s2083 + $0x40] sm:$0xff]
                  %2102 = vst [vmem:[%s2084 + $0x370] sm:$0xff] %v2101
                  %v2103 = vld [vmem:[%s2083 + $0x48] sm:$0xff]
                  %2104 = vst [vmem:[%s2084 + $0x510] sm:$0xff] %v2103
                  %v2105 = vld [vmem:[%s2083 + $0x50] sm:$0xff]
                  %2106 = vst [vmem:[%s2084 + $0x518] sm:$0xff] %v2105
                  %v2107 = vld [vmem:[%s2083 + $0x58] sm:$0xff]
                  %2108 = vst [vmem:[%s2084 + $0x520] sm:$0xff] %v2107
                  %v2109 = vld [vmem:[%s2083 + $0x60] sm:$0xff]
                  %2110 = vst [vmem:[%s2084 + $0x6c0] sm:$0xff] %v2109
                  %v2111 = vld [vmem:[%s2083 + $0x68] sm:$0xff]
                  %2112 = vst [vmem:[%s2084 + $0x6c8] sm:$0xff] %v2111
                  %v2113 = vld [vmem:[%s2083 + $0x70] sm:$0xff]
                  %2114 = vst [vmem:[%s2084 + $0x6d0] sm:$0xff] %v2113
                  %v2115 = vld [vmem:[%s2083 + $0x78] sm:$0xff]
                  %2116 = vst [vmem:[%s2084 + $0x870] sm:$0xff] %v2115
                  %v2117 = vld [vmem:[%s2083 + $0x80] sm:$0xff]
                  %2118 = vst [vmem:[%s2084 + $0x878] sm:$0xff] %v2117
                  %v2119 = vld [vmem:[%s2083 + $0x88] sm:$0xff]
                  %2120 = vst [vmem:[%s2084 + $0x880] sm:$0xff] %v2119
                  %v2121 = vld [vmem:[%s2083 + $0x90] sm:$0xff]
                  %2122 = vst [vmem:[%s2084 + $0xa20] sm:$0xff] %v2121
                  %v2123 = vld [vmem:[%s2083 + $0x98] sm:$0xff]
                  %2124 = vst [vmem:[%s2084 + $0xa28] sm:$0xff] %v2123
                  %v2125 = vld [vmem:[%s2083 + $0xa0] sm:$0xff]
                  %2126 = vst [vmem:[%s2084 + $0xa30] sm:$0xff] %v2125
                  %v2127 = vld [vmem:[%s2083 + $0xa8] sm:$0xff]
                  %2128 = vst [vmem:[%s2084 + $0xbd0] sm:$0xff] %v2127
                  %v2129 = vld [vmem:[%s2083 + $0xb0] sm:$0xff]
                  %2130 = vst [vmem:[%s2084 + $0xbd8] sm:$0xff] %v2129
                  %v2131 = vld [vmem:[%s2083 + $0xb8] sm:$0xff]
                  %2132 = vst [vmem:[%s2084 + $0xbe0] sm:$0xff] %v2131
                $region68: #{conv_transpose_block_3d.1} parent=62 // loop_footer
                  %s2082 = sadd.s32 1, %s2078
                $region69: #{conv_transpose_block_3d.1} parent=62 // loop_footer_branch
                  %2077 = sbr.rel target = $region65
                $region70: #{conv_transpose_block_3d.1} parent=62 // loop_exit
                  _
              $region63: #{conv_transpose_block_3d.1} parent=47 // pred_fallthru
                _
              // Predicated region
              $region71: #{conv_transpose_block_3d.1} parent=47 // pred_check
                _
              $region72: #{conv_transpose_block_3d.1} parent=47 // pred_check_branch
                %2134 = sbr.rel target = $region74
              $region73: #{conv_transpose_block_3d.1} parent=47 // pred_region
                _
              $region74: #{conv_transpose_block_3d.1} parent=47 // pred_fallthru
                _
            $region48: #{conv_transpose_block_3d.1} parent=43 // pred_fallthru
              _
            // Predicated region
            $region49: #{conv_transpose_block_3d.1} parent=43 // pred_check
              _
            $region50: #{conv_transpose_block_3d.1} parent=43 // pred_check_branch
              %2016 = sbr.rel target = $region52
            $region51: #{conv_transpose_block_3d.1} parent=43 // pred_region
              %s2018 = ssub.s32 256, 1
              loop: start=0, step=1, limit=1
              $region53: #{conv_transpose_block_3d.1} parent=51 // loop_pre_header
                _
              $region54: #{conv_transpose_block_3d.1} parent=51 // loop_header
                %s2020 = sphi 0, %s2024
                %p2021 = scmp.ge.s32.totalorder %s2020, 1
                %s2025 = sphi %s2002, %s2002
                %s2026 = sphi %s2010, %s2010
              $region55: #{conv_transpose_block_3d.1} parent=51 // loop_header_branch
                %2023 = sbr.rel (%p2021) target = $region59
              $region56: #{conv_transpose_block_3d.1} parent=51 // loop_body
                %v2027 = vld [vmem:[%s2025] sm:%s2018]
                %2028 = vst [vmem:[%s2026] sm:%s2018] %v2027
                %v2029 = vld [vmem:[%s2025 + $0x8] sm:%s2018]
                %2030 = vst [vmem:[%s2026 + $0x8] sm:%s2018] %v2029
                %v2031 = vld [vmem:[%s2025 + $0x10] sm:%s2018]
                %2032 = vst [vmem:[%s2026 + $0x10] sm:%s2018] %v2031
                %v2033 = vld [vmem:[%s2025 + $0x18] sm:%s2018]
                %2034 = vst [vmem:[%s2026 + $0x1b0] sm:%s2018] %v2033
                %v2035 = vld [vmem:[%s2025 + $0x20] sm:%s2018]
                %2036 = vst [vmem:[%s2026 + $0x1b8] sm:%s2018] %v2035
                %v2037 = vld [vmem:[%s2025 + $0x28] sm:%s2018]
                %2038 = vst [vmem:[%s2026 + $0x1c0] sm:%s2018] %v2037
                %v2039 = vld [vmem:[%s2025 + $0x30] sm:%s2018]
                %2040 = vst [vmem:[%s2026 + $0x360] sm:%s2018] %v2039
                %v2041 = vld [vmem:[%s2025 + $0x38] sm:%s2018]
                %2042 = vst [vmem:[%s2026 + $0x368] sm:%s2018] %v2041
                %v2043 = vld [vmem:[%s2025 + $0x40] sm:%s2018]
                %2044 = vst [vmem:[%s2026 + $0x370] sm:%s2018] %v2043
                %v2045 = vld [vmem:[%s2025 + $0x48] sm:%s2018]
                %2046 = vst [vmem:[%s2026 + $0x510] sm:%s2018] %v2045
                %v2047 = vld [vmem:[%s2025 + $0x50] sm:%s2018]
                %2048 = vst [vmem:[%s2026 + $0x518] sm:%s2018] %v2047
                %v2049 = vld [vmem:[%s2025 + $0x58] sm:%s2018]
                %2050 = vst [vmem:[%s2026 + $0x520] sm:%s2018] %v2049
                %v2051 = vld [vmem:[%s2025 + $0x60] sm:%s2018]
                %2052 = vst [vmem:[%s2026 + $0x6c0] sm:%s2018] %v2051
                %v2053 = vld [vmem:[%s2025 + $0x68] sm:%s2018]
                %2054 = vst [vmem:[%s2026 + $0x6c8] sm:%s2018] %v2053
                %v2055 = vld [vmem:[%s2025 + $0x70] sm:%s2018]
                %2056 = vst [vmem:[%s2026 + $0x6d0] sm:%s2018] %v2055
                %v2057 = vld [vmem:[%s2025 + $0x78] sm:%s2018]
                %2058 = vst [vmem:[%s2026 + $0x870] sm:%s2018] %v2057
                %v2059 = vld [vmem:[%s2025 + $0x80] sm:%s2018]
                %2060 = vst [vmem:[%s2026 + $0x878] sm:%s2018] %v2059
                %v2061 = vld [vmem:[%s2025 + $0x88] sm:%s2018]
                %2062 = vst [vmem:[%s2026 + $0x880] sm:%s2018] %v2061
                %v2063 = vld [vmem:[%s2025 + $0x90] sm:%s2018]
                %2064 = vst [vmem:[%s2026 + $0xa20] sm:%s2018] %v2063
                %v2065 = vld [vmem:[%s2025 + $0x98] sm:%s2018]
                %2066 = vst [vmem:[%s2026 + $0xa28] sm:%s2018] %v2065
                %v2067 = vld [vmem:[%s2025 + $0xa0] sm:%s2018]
                %2068 = vst [vmem:[%s2026 + $0xa30] sm:%s2018] %v2067
                %v2069 = vld [vmem:[%s2025 + $0xa8] sm:%s2018]
                %2070 = vst [vmem:[%s2026 + $0xbd0] sm:%s2018] %v2069
                %v2071 = vld [vmem:[%s2025 + $0xb0] sm:%s2018]
                %2072 = vst [vmem:[%s2026 + $0xbd8] sm:%s2018] %v2071
                %v2073 = vld [vmem:[%s2025 + $0xb8] sm:%s2018]
                %2074 = vst [vmem:[%s2026 + $0xbe0] sm:%s2018] %v2073
              $region57: #{conv_transpose_block_3d.1} parent=51 // loop_footer
                %s2024 = sadd.s32 1, %s2020
              $region58: #{conv_transpose_block_3d.1} parent=51 // loop_footer_branch
                %2019 = sbr.rel target = $region54
              $region59: #{conv_transpose_block_3d.1} parent=51 // loop_exit
                _
            $region52: #{conv_transpose_block_3d.1} parent=43 // pred_fallthru
              _
          $region44: #{conv_transpose_block_3d.1} parent=39 // pred_fallthru
            _
          %2135 = vnop
        $region40: #{conv_transpose_block_3d.1} parent=35 // pred_fallthru
          _
      $region36: #{conv_transpose_block_3d.1} parent=5 // pred_fallthru
        _
      %p2136 = scmp.le.s32.totalorder 2, %s10
      // Predicated region
      $region75: #{conv_transpose_block_3d.1} parent=5 // pred_check
        %p2137 = pneg %p2136
      $region76: #{conv_transpose_block_3d.1} parent=5 // pred_check_branch
        %2139 = sbr.rel (%p2137) target = $region78
      $region77: #{conv_transpose_block_3d.1} parent=5 // pred_region
        %s2140 = ssub.s32 %s10, 2
        // Predicated region
        $region79: #{conv_transpose_block_3d.1} parent=77 // pred_check
          %p2141 = pneg %p162
        $region80: #{conv_transpose_block_3d.1} parent=77 // pred_check_branch
          %2143 = sbr.rel (%p2141) target = $region82
        $region81: #{conv_transpose_block_3d.1} parent=77 // pred_region
          %s2144 = sand.u32 %s147, 1
          %s2145 = sand.u32 %s147, 1
          %s2146 = smul.addr %s2145, 192
          %s2147 = scalar_lea.vmem [#allocation3], %s2146
        $region82: #{conv_transpose_block_3d.1} parent=77 // pred_fallthru
          _
      $region78: #{conv_transpose_block_3d.1} parent=5 // pred_fallthru
        _
    $region6: #{conv_transpose_block_3d.1} parent=1 // loop_footer
      %s14 = sadd.s32 1, %s10
    $region7: #{conv_transpose_block_3d.1} parent=1 // loop_footer_branch
      %9 = sbr.rel target = $region3
    $region8: #{conv_transpose_block_3d.1} parent=1 // loop_exit
      _

</llo_original>
